<compile_context>
chip_gen: v7x
topology: tpu7x:2x2x1
jax: 0.10.0
libtpu: 0.0.40
codegen_flags: <defaults>
</compile_context>

<pallas_src>
import math

import jax
import jax.numpy as jnp
from jax.experimental import pallas as pl
from jax.experimental.pallas import tpu as pltpu


INV_SQRT2 = 1.0 / math.sqrt(2.0)


# ----------------------------------------------------------------------------
# Fused Pallas kernel: conv_in -> LAYERS x residual block -> output head
# ----------------------------------------------------------------------------
def _fused_forward_kernel(x_ref, dproj_ref, inw_ref, inb_ref,
                          akron_ref, atw_ref, tb_ref,
                          fw_ref, fb_ref, mw_ref, mb_ref, ow_ref, ob_ref,
                          op1w_ref, op1b_ref, op2w_ref, op2b_ref,
                          o_ref):
    """Whole forward pass, single block.

    Activation layout: (B*C, N) with N = J*L = 128 on the lane axis and the
    batch folded onto sublanes (row = b*C + c).  Right-multiplied operators
    (a_kron, atw_big) act per row; left-multiplied ones are kron(I_B, W)
    block-diagonals, so there are zero in-kernel reshapes/transposes.
    """
    f32 = jnp.float32
    bf16 = jnp.bfloat16
    n_layers = dproj_ref.shape[0]
    BC = dproj_ref.shape[1]                               # B * channels

    def mxu(a, b):
        # bf16 operands, f32 accumulation (MXU-native on v5e/v6e/v7x).
        return jnp.dot(a.astype(bf16), b.astype(bf16),
                       preferred_element_type=f32)

    # input 1x1 conv + ReLU:   (B*C, B*Din) @ (B*Din, N)
    h = jnp.maximum(mxu(inw_ref[...], x_ref[...]) + inb_ref[...], 0.0)

    a_kron = akron_ref[...]                               # (N, N), bf16
    skip = jnp.zeros_like(h)

    for l in range(n_layers):                             # static unroll
        # diffusion-embedding projection broadcast add
        y = h + dproj_ref[l]                              # (BC, N) + (BC, 1)

        # forward_time: relu(adj @ Y @ time_w + time_b), fused operator
        y = jnp.maximum(mxu(y, atw_ref[l]) + tb_ref[l], 0.0)

        # forward_feature: relu(feat_w^T @ (adj-aggregated y) + feat_b)
        agg = mxu(y, a_kron)                              # (BC, N)
        y = jnp.maximum(mxu(fw_ref[l], agg) + fb_ref[l], 0.0)

        # mid projection + gated activation (gate rows [:BC], filter [BC:])
        z = mxu(mw_ref[l], y) + mb_ref[l]                 # (2*BC, N)
        y = jax.nn.sigmoid(z[:BC]) * jnp.tanh(z[BC:])

        # output projection: residual rows [:BC], skip rows [BC:]
        z = mxu(ow_ref[l], y) + ob_ref[l]                 # (2*BC, N)
        h = (h + z[:BC]) * INV_SQRT2
        skip = skip + z[BC:]

    # output head: (scale folded into op1 weights) -> relu -> op2
    y = jnp.maximum(mxu(op1w_ref[...], skip) + op1b_ref[...], 0.0)
    o_ref[...] = (mxu(op2w_ref[...], y) + op2b_ref[...]).astype(o_ref.dtype)


# ----------------------------------------------------------------------------
# Parameter construction (deterministic, synthetic)
# ----------------------------------------------------------------------------
def _kaiming(key, shape, fan_in):
    return (math.sqrt(2.0 / fan_in) * jax.random.normal(key, shape)).astype(jnp.float32)


def _small(key, shape):
    return (0.01 * jax.random.normal(key, shape)).astype(jnp.float32)


def build_adjacency(n_joints):
    # TODO(synk): adj_mx_from_skeleton source unavailable; normalized chain skeleton.
    a = jnp.zeros((n_joints, n_joints), jnp.float32)
    idx = jnp.arange(n_joints - 1)
    a = a.at[idx, idx + 1].set(1.0)
    a = a.at[idx + 1, idx].set(1.0)
    a = a + jnp.eye(n_joints, dtype=jnp.float32)
    d = jnp.sum(a, axis=1)
    dinv = 1.0 / jnp.sqrt(d)
    return a * dinv[:, None] * dinv[None, :]


def build_diffusion_table(num_steps, emb_dim):
    half = emb_dim // 2
    steps = jnp.arange(num_steps, dtype=jnp.float32)[:, None]
    freqs = 10.0 ** (jnp.arange(half, dtype=jnp.float32) / (half - 1) * 4.0)[None, :]
    table = steps * freqs
    return jnp.concatenate([jnp.sin(table), jnp.cos(table)], axis=1)   # (T, E)


def init_params(seed, *, channels, n_in, n_out, seq_len, n_joints, emb_dim,
                num_steps, layers):
    key = jax.random.PRNGKey(seed)
    ks = iter(jax.random.split(key, 16 + 16 * layers))
    C, L = channels, seq_len
    p = {
        "adj": build_adjacency(n_joints),
        # DiffusionEmbedding (standard CSDI style: table -> linear/silu x2)
        "diff_table": build_diffusion_table(num_steps, emb_dim),
        "diff_w1": _kaiming(next(ks), (emb_dim, emb_dim), emb_dim),
        "diff_b1": _small(next(ks), (emb_dim,)),
        "diff_w2": _kaiming(next(ks), (emb_dim, emb_dim), emb_dim),
        "diff_b2": _small(next(ks), (emb_dim,)),
        # top-level 1x1 convs
        "in_w": _kaiming(next(ks), (C, n_in), n_in),
        "in_b": _small(next(ks), (C, 1)),
        "op1_w": _kaiming(next(ks), (C, C), C),
        "op1_b": _small(next(ks), (C, 1)),
        "op2_w": jnp.zeros((n_out, C), jnp.float32),      # nn.init.zeros_
        "op2_b": _small(next(ks), (n_out, 1)),
        "layers": [],
    }
    for _ in range(layers):
        lp = {
            "dp_w": _kaiming(next(ks), (C, emb_dim), emb_dim),   # Linear E->C
            "dp_b": _small(next(ks), (C,)),
            "time_w": _kaiming(next(ks), (L, L), L),
            "time_b": _small(next(ks), (1, L)),
            "feat_w": _kaiming(next(ks), (C, C), C),
            "feat_b": _small(next(ks), (1, C)),
            "mid_w": _kaiming(next(ks), (2 * C, C), C),
            "mid_b": _small(next(ks), (2 * C, 1)),
            "out_w": _kaiming(next(ks), (2 * C, C), C),
            "out_b": _small(next(ks), (2 * C, 1)),
        }
        p["layers"].append(lp)
    return p


def _check_kron_layout(adj, time_w):
    """One-time eager check: kron operators reproduce adj @ Y @ W for the
    j*L + l flattening assumed by x.reshape(B, D, J*L)."""
    J = adj.shape[0]
    L = time_w.shape[0]
    y = jax.random.normal(jax.random.PRNGKey(123), (J, L), dtype=jnp.float32)
    ref = adj @ y @ time_w
    a_kron = jnp.kron(adj.T, jnp.eye(L, dtype=jnp.float32))
    tw_big = jnp.kron(jnp.eye(J, dtype=jnp.float32), time_w)
    got = (y.reshape(1, J * L) @ (a_kron @ tw_big)).reshape(J, L)
    assert bool(jnp.allclose(ref, got, atol=1e-3, rtol=1e-3)), \
        "kron-expanded operator layout does not match adj @ Y @ W"


def pack_for_kernel(p, batch):
    """Build the batch-folded, kron-expanded weight pack for the fused kernel."""
    f32, bf16 = jnp.float32, jnp.bfloat16
    C = p["in_w"].shape[0]
    J = p["adj"].shape[0]
    L = p["layers"][0]["time_w"].shape[0]
    n_layers = len(p["layers"])
    eye_B = jnp.eye(batch, dtype=f32)
    eye_J = jnp.eye(J, dtype=f32)
    eye_L = jnp.eye(L, dtype=f32)

    _check_kron_layout(p["adj"], p["layers"][0]["time_w"])

    a_kron = jnp.kron(p["adj"].T, eye_L)                   # (N, N)

    def kb(w):                                             # kron(I_B, W)
        return jnp.kron(eye_B, w)

    def tile_b(col):                                       # (r,1) bias -> (B*r,1)
        return jnp.tile(col, (batch, 1))

    scale = 1.0 / math.sqrt(n_layers)
    pack = {
        "diff_table": p["diff_table"],
        "diff_w1": p["diff_w1"], "diff_b1": p["diff_b1"],
        "diff_w2": p["diff_w2"], "diff_b2": p["diff_b2"],
        "in_w": kb(p["in_w"]).astype(bf16),                # (B*C, B*Din)
        "in_b": tile_b(p["in_b"]),                         # (B*C, 1)
        "a_kron": a_kron.astype(bf16),                     # (N, N)
        "op1_w": (scale * kb(p["op1_w"])).astype(bf16),    # scale folded in
        "op1_b": tile_b(p["op1_b"]),
        "op2_w": kb(p["op2_w"]).astype(bf16),              # (B*n_out, B*C)
        "op2_b": tile_b(p["op2_b"]),
    }

    atw, tbb, fw, fb, mw, mb, ow, ob, dpw, dpb = ([] for _ in range(10))
    for lp in p["layers"]:
        tw_big = jnp.kron(eye_J, lp["time_w"])             # (N, N)
        atw.append((a_kron @ tw_big).astype(bf16))         # fused adj+time op
        tbb.append(jnp.tile(lp["time_b"], (1, J)))         # (1, N)
        fw.append(kb(lp["feat_w"].T).astype(bf16))         # (B*C, B*C)
        fb.append(tile_b(lp["feat_b"].T))                  # (B*C, 1)
        mw.append(jnp.concatenate(
            [kb(lp["mid_w"][:C]), kb(lp["mid_w"][C:])], axis=0).astype(bf16))
        mb.append(jnp.concatenate(
            [tile_b(lp["mid_b"][:C]), tile_b(lp["mid_b"][C:])], axis=0))
        ow.append(jnp.concatenate(
            [kb(lp["out_w"][:C]), kb(lp["out_w"][C:])], axis=0).astype(bf16))
        ob.append(jnp.concatenate(
            [tile_b(lp["out_b"][:C]), tile_b(lp["out_b"][C:])], axis=0))
        dpw.append(lp["dp_w"])
        dpb.append(lp["dp_b"])

    pack["atw"] = jnp.stack(atw)                           # (LAYERS, N, N)
    pack["tbb"] = jnp.stack(tbb)                           # (LAYERS, 1, N)
    pack["fw"] = jnp.stack(fw)                             # (LAYERS, B*C, B*C)
    pack["fb"] = jnp.stack(fb)                             # (LAYERS, B*C, 1)
    pack["mw"] = jnp.stack(mw)                             # (LAYERS, 2*B*C, B*C)
    pack["mb"] = jnp.stack(mb)
    pack["ow"] = jnp.stack(ow)
    pack["ob"] = jnp.stack(ob)
    pack["dp_w"] = jnp.stack(dpw)                          # (LAYERS, C, E)
    pack["dp_b"] = jnp.stack(dpb)                          # (LAYERS, C)
    return pack


# ----------------------------------------------------------------------------
# Forward pass
# ----------------------------------------------------------------------------
def lift_ct_gcn_forward(pack, x, diffusion_step):
    B, D, J, L = x.shape
    N = J * L
    n_layers, C = pack["dp_w"].shape[0], pack["dp_w"].shape[1]
    BC = pack["in_b"].shape[0]                             # B * C
    n_out_rows = pack["op2_b"].shape[0]                    # B * n_out

    # diffusion embedding (table lookup + 2 tiny silu linears) — plain JAX
    demb = pack["diff_table"][diffusion_step]              # (B, E)
    demb = jax.nn.silu(demb @ pack["diff_w1"].T + pack["diff_b1"])
    demb = jax.nn.silu(demb @ pack["diff_w2"].T + pack["diff_b2"])

    # all layers' diffusion projections in one batched einsum
    dproj = (jnp.einsum("be,lce->lbc", demb, pack["dp_w"])
             + pack["dp_b"][:, None, :])                   # (LAYERS, B, C)
    dproj = dproj.reshape(n_layers, BC, 1)

    out = pl.pallas_call(
        _fused_forward_kernel,
        out_shape=jax.ShapeDtypeStruct((n_out_rows, N), jnp.float32),
    )(x.reshape(B * D, N), dproj,
      pack["in_w"], pack["in_b"],
      pack["a_kron"], pack["atw"], pack["tbb"],
      pack["fw"], pack["fb"], pack["mw"], pack["mb"], pack["ow"], pack["ob"],
      pack["op1_w"], pack["op1_b"], pack["op2_w"], pack["op2_b"])

    return out.reshape(B, n_out_rows // B, J, L)


# ----------------------------------------------------------------------------
# Main
# ----------------------------------------------------------------------------
if __name__ == "__main__":
    B = 2            # batch
    D_IN = 5         # n_input_coords
    D_OUT = 3        # n_output_coords
    J = 16           # joints (skeleton nodes)
    L = 8            # seq_len  (J*L = 128 -> lane-dense)
    C = 32           # channels
    E = 32           # diffusion_embedding_dim
    NUM_STEPS = 50
    LAYERS = 2

    params = init_params(0, channels=C, n_in=D_IN, n_out=D_OUT, seq_len=L,
                         n_joints=J, emb_dim=E, num_steps=NUM_STEPS,
                         layers=LAYERS)
    pack = pack_for_kernel(params, B)

    key = jax.random.PRNGKey(0)
    kx, ks = jax.random.split(key)
    x = jax.random.normal(kx, (B, D_IN, J, L), dtype=jnp.float32)
    diffusion_step = jax.random.randint(ks, (B,), 0, NUM_STEPS)

    out = jax.jit(lift_ct_gcn_forward)(pack, x, diffusion_step)
    out = jax.block_until_ready(out)
    assert out.shape == (B, D_OUT, J, L), out.shape
    assert bool(jnp.all(jnp.isfinite(out)))
    print("KERNEL_OK")
</pallas_src>

<mosaic_0001>
module attributes {stable_mosaic.version = 11 : i64} {
  func.func @_fused_forward_kernel(%arg0: memref<10x128xf32, #tpu.memory_space<vmem>>, %arg1: memref<2x64x1xf32, #tpu.memory_space<vmem>>, %arg2: memref<64x10xbf16, #tpu.memory_space<vmem>>, %arg3: memref<64x1xf32, #tpu.memory_space<vmem>>, %arg4: memref<128x128xbf16, #tpu.memory_space<vmem>>, %arg5: memref<2x128x128xbf16, #tpu.memory_space<vmem>>, %arg6: memref<2x1x128xf32, #tpu.memory_space<vmem>>, %arg7: memref<2x64x64xbf16, #tpu.memory_space<vmem>>, %arg8: memref<2x64x1xf32, #tpu.memory_space<vmem>>, %arg9: memref<2x128x64xbf16, #tpu.memory_space<vmem>>, %arg10: memref<2x128x1xf32, #tpu.memory_space<vmem>>, %arg11: memref<2x128x64xbf16, #tpu.memory_space<vmem>>, %arg12: memref<2x128x1xf32, #tpu.memory_space<vmem>>, %arg13: memref<64x64xbf16, #tpu.memory_space<vmem>>, %arg14: memref<64x1xf32, #tpu.memory_space<vmem>>, %arg15: memref<6x64xbf16, #tpu.memory_space<vmem>>, %arg16: memref<6x1xf32, #tpu.memory_space<vmem>>, %arg17: memref<6x128xf32, #tpu.memory_space<vmem>>) attributes {dimension_semantics = [], scalar_prefetch = 0 : i64, scratch_operands = 0 : i64, tpu.core_type = #tpu.core_type<tc>} {
    %c0 = arith.constant 0 : index
    %c0_0 = arith.constant 0 : index
    %0 = vector.load %arg2[%c0, %c0_0] : memref<64x10xbf16, #tpu.memory_space<vmem>>, vector<64x10xbf16>
    %c0_1 = arith.constant 0 : index
    %c0_2 = arith.constant 0 : index
    %1 = vector.load %arg0[%c0_1, %c0_2] : memref<10x128xf32, #tpu.memory_space<vmem>>, vector<10x128xf32>
    %2 = arith.truncf %1 : vector<10x128xf32> to vector<10x128xbf16>
    %cst = arith.constant dense<0.000000e+00> : vector<64x128xf32>
    %3 = tpu.matmul %0, %2, %cst {dimension_numbers = #tpu.dot_dimension_numbers<[1], [0], [0], [1], [0, 0, 1, 1], [], []>} : vector<64x10xbf16>, vector<10x128xbf16>, vector<64x128xf32> -> vector<64x128xf32>
    %c0_3 = arith.constant 0 : index
    %c0_4 = arith.constant 0 : index
    %4 = vector.load %arg3[%c0_3, %c0_4] : memref<64x1xf32, #tpu.memory_space<vmem>>, vector<64x1xf32>
    %5 = vector.broadcast %4 : vector<64x1xf32> to vector<64x128xf32>
    %6 = arith.addf %3, %5 : vector<64x128xf32>
    %cst_5 = arith.constant 0.000000e+00 : f32
    %7 = vector.broadcast %cst_5 : f32 to vector<64x128xf32>
    %8 = arith.maximumf %6, %7 : vector<64x128xf32>
    %c0_6 = arith.constant 0 : index
    %c0_7 = arith.constant 0 : index
    %9 = vector.load %arg4[%c0_6, %c0_7] : memref<128x128xbf16, #tpu.memory_space<vmem>>, vector<128x128xbf16>
    %cst_8 = arith.constant 0.000000e+00 : f32
    %10 = vector.broadcast %cst_8 : f32 to vector<64x128xf32>
    %c0_9 = arith.constant 0 : index
    %c0_10 = arith.constant 0 : index
    %c0_11 = arith.constant 0 : index
    %11 = vector.load %arg1[%c0_9, %c0_10, %c0_11] : memref<2x64x1xf32, #tpu.memory_space<vmem>>, vector<1x64x1xf32>
    %12 = vector.shape_cast %11 : vector<1x64x1xf32> to vector<64x1xf32>
    %13 = vector.broadcast %12 : vector<64x1xf32> to vector<64x128xf32>
    %14 = arith.addf %8, %13 : vector<64x128xf32>
    %c0_12 = arith.constant 0 : index
    %c0_13 = arith.constant 0 : index
    %c0_14 = arith.constant 0 : index
    %15 = vector.load %arg5[%c0_12, %c0_13, %c0_14] : memref<2x128x128xbf16, #tpu.memory_space<vmem>>, vector<1x128x128xbf16>
    %16 = vector.shape_cast %15 : vector<1x128x128xbf16> to vector<128x128xbf16>
    %17 = arith.truncf %14 : vector<64x128xf32> to vector<64x128xbf16>
    %cst_15 = arith.constant dense<0.000000e+00> : vector<64x128xf32>
    %18 = tpu.matmul %17, %16, %cst_15 {dimension_numbers = #tpu.dot_dimension_numbers<[1], [0], [0], [1], [0, 0, 1, 1], [], []>} : vector<64x128xbf16>, vector<128x128xbf16>, vector<64x128xf32> -> vector<64x128xf32>
    %c0_16 = arith.constant 0 : index
    %c0_17 = arith.constant 0 : index
    %c0_18 = arith.constant 0 : index
    %19 = vector.load %arg6[%c0_16, %c0_17, %c0_18] : memref<2x1x128xf32, #tpu.memory_space<vmem>>, vector<1x1x128xf32>
    %20 = vector.shape_cast %19 : vector<1x1x128xf32> to vector<1x128xf32>
    %21 = vector.broadcast %20 : vector<1x128xf32> to vector<64x128xf32>
    %22 = arith.addf %18, %21 : vector<64x128xf32>
    %cst_19 = arith.constant 0.000000e+00 : f32
    %23 = vector.broadcast %cst_19 : f32 to vector<64x128xf32>
    %24 = arith.maximumf %22, %23 : vector<64x128xf32>
    %25 = arith.truncf %24 : vector<64x128xf32> to vector<64x128xbf16>
    %cst_20 = arith.constant dense<0.000000e+00> : vector<64x128xf32>
    %26 = tpu.matmul %25, %9, %cst_20 {dimension_numbers = #tpu.dot_dimension_numbers<[1], [0], [0], [1], [0, 0, 1, 1], [], []>} : vector<64x128xbf16>, vector<128x128xbf16>, vector<64x128xf32> -> vector<64x128xf32>
    %c0_21 = arith.constant 0 : index
    %c0_22 = arith.constant 0 : index
    %c0_23 = arith.constant 0 : index
    %27 = vector.load %arg7[%c0_21, %c0_22, %c0_23] : memref<2x64x64xbf16, #tpu.memory_space<vmem>>, vector<1x64x64xbf16>
    %28 = vector.shape_cast %27 : vector<1x64x64xbf16> to vector<64x64xbf16>
    %29 = arith.truncf %26 : vector<64x128xf32> to vector<64x128xbf16>
    %cst_24 = arith.constant dense<0.000000e+00> : vector<64x128xf32>
    %30 = tpu.matmul %28, %29, %cst_24 {dimension_numbers = #tpu.dot_dimension_numbers<[1], [0], [0], [1], [0, 0, 1, 1], [], []>} : vector<64x64xbf16>, vector<64x128xbf16>, vector<64x128xf32> -> vector<64x128xf32>
    %c0_25 = arith.constant 0 : index
    %c0_26 = arith.constant 0 : index
    %c0_27 = arith.constant 0 : index
    %31 = vector.load %arg8[%c0_25, %c0_26, %c0_27] : memref<2x64x1xf32, #tpu.memory_space<vmem>>, vector<1x64x1xf32>
    %32 = vector.shape_cast %31 : vector<1x64x1xf32> to vector<64x1xf32>
    %33 = vector.broadcast %32 : vector<64x1xf32> to vector<64x128xf32>
    %34 = arith.addf %30, %33 : vector<64x128xf32>
    %cst_28 = arith.constant 0.000000e+00 : f32
    %35 = vector.broadcast %cst_28 : f32 to vector<64x128xf32>
    %36 = arith.maximumf %34, %35 : vector<64x128xf32>
    %c0_29 = arith.constant 0 : index
    %c0_30 = arith.constant 0 : index
    %c0_31 = arith.constant 0 : index
    %37 = vector.load %arg9[%c0_29, %c0_30, %c0_31] : memref<2x128x64xbf16, #tpu.memory_space<vmem>>, vector<1x128x64xbf16>
    %38 = vector.shape_cast %37 : vector<1x128x64xbf16> to vector<128x64xbf16>
    %39 = arith.truncf %36 : vector<64x128xf32> to vector<64x128xbf16>
    %cst_32 = arith.constant dense<0.000000e+00> : vector<128x128xf32>
    %40 = tpu.matmul %38, %39, %cst_32 {dimension_numbers = #tpu.dot_dimension_numbers<[1], [0], [0], [1], [0, 0, 1, 1], [], []>} : vector<128x64xbf16>, vector<64x128xbf16>, vector<128x128xf32> -> vector<128x128xf32>
    %c0_33 = arith.constant 0 : index
    %c0_34 = arith.constant 0 : index
    %c0_35 = arith.constant 0 : index
    %41 = vector.load %arg10[%c0_33, %c0_34, %c0_35] : memref<2x128x1xf32, #tpu.memory_space<vmem>>, vector<1x128x1xf32>
    %42 = vector.shape_cast %41 : vector<1x128x1xf32> to vector<128x1xf32>
    %43 = vector.broadcast %42 : vector<128x1xf32> to vector<128x128xf32>
    %44 = arith.addf %40, %43 : vector<128x128xf32>
    %45 = vector.extract_strided_slice %44 {offsets = [0, 0], sizes = [64, 128], strides = [1, 1]} : vector<128x128xf32> to vector<64x128xf32>
    %46 = arith.negf %45 : vector<64x128xf32>
    %47 = math.exp %46 : vector<64x128xf32>
    %cst_36 = arith.constant 1.000000e+00 : f32
    %48 = vector.broadcast %cst_36 : f32 to vector<64x128xf32>
    %49 = arith.addf %48, %47 : vector<64x128xf32>
    %50 = arith.divf %48, %49 : vector<64x128xf32>
    %51 = vector.extract_strided_slice %44 {offsets = [64, 0], sizes = [64, 128], strides = [1, 1]} : vector<128x128xf32> to vector<64x128xf32>
    %52 = math.tanh %51 : vector<64x128xf32>
    %53 = arith.mulf %50, %52 : vector<64x128xf32>
    %c0_37 = arith.constant 0 : index
    %c0_38 = arith.constant 0 : index
    %c0_39 = arith.constant 0 : index
    %54 = vector.load %arg11[%c0_37, %c0_38, %c0_39] : memref<2x128x64xbf16, #tpu.memory_space<vmem>>, vector<1x128x64xbf16>
    %55 = vector.shape_cast %54 : vector<1x128x64xbf16> to vector<128x64xbf16>
    %56 = arith.truncf %53 : vector<64x128xf32> to vector<64x128xbf16>
    %cst_40 = arith.constant dense<0.000000e+00> : vector<128x128xf32>
    %57 = tpu.matmul %55, %56, %cst_40 {dimension_numbers = #tpu.dot_dimension_numbers<[1], [0], [0], [1], [0, 0, 1, 1], [], []>} : vector<128x64xbf16>, vector<64x128xbf16>, vector<128x128xf32> -> vector<128x128xf32>
    %c0_41 = arith.constant 0 : index
    %c0_42 = arith.constant 0 : index
    %c0_43 = arith.constant 0 : index
    %58 = vector.load %arg12[%c0_41, %c0_42, %c0_43] : memref<2x128x1xf32, #tpu.memory_space<vmem>>, vector<1x128x1xf32>
    %59 = vector.shape_cast %58 : vector<1x128x1xf32> to vector<128x1xf32>
    %60 = vector.broadcast %59 : vector<128x1xf32> to vector<128x128xf32>
    %61 = arith.addf %57, %60 : vector<128x128xf32>
    %62 = vector.extract_strided_slice %61 {offsets = [0, 0], sizes = [64, 128], strides = [1, 1]} : vector<128x128xf32> to vector<64x128xf32>
    %63 = arith.addf %8, %62 : vector<64x128xf32>
    %cst_44 = arith.constant 0.707106769 : f32
    %64 = vector.broadcast %cst_44 : f32 to vector<64x128xf32>
    %65 = arith.mulf %63, %64 : vector<64x128xf32>
    %66 = vector.extract_strided_slice %61 {offsets = [64, 0], sizes = [64, 128], strides = [1, 1]} : vector<128x128xf32> to vector<64x128xf32>
    %67 = arith.addf %10, %66 : vector<64x128xf32>
    %c1 = arith.constant 1 : index
    %c0_45 = arith.constant 0 : index
    %c0_46 = arith.constant 0 : index
    %68 = vector.load %arg1[%c1, %c0_45, %c0_46] : memref<2x64x1xf32, #tpu.memory_space<vmem>>, vector<1x64x1xf32>
    %69 = vector.shape_cast %68 : vector<1x64x1xf32> to vector<64x1xf32>
    %70 = vector.broadcast %69 : vector<64x1xf32> to vector<64x128xf32>
    %71 = arith.addf %65, %70 : vector<64x128xf32>
    %c1_47 = arith.constant 1 : index
    %c0_48 = arith.constant 0 : index
    %c0_49 = arith.constant 0 : index
    %72 = vector.load %arg5[%c1_47, %c0_48, %c0_49] : memref<2x128x128xbf16, #tpu.memory_space<vmem>>, vector<1x128x128xbf16>
    %73 = vector.shape_cast %72 : vector<1x128x128xbf16> to vector<128x128xbf16>
    %74 = arith.truncf %71 : vector<64x128xf32> to vector<64x128xbf16>
    %cst_50 = arith.constant dense<0.000000e+00> : vector<64x128xf32>
    %75 = tpu.matmul %74, %73, %cst_50 {dimension_numbers = #tpu.dot_dimension_numbers<[1], [0], [0], [1], [0, 0, 1, 1], [], []>} : vector<64x128xbf16>, vector<128x128xbf16>, vector<64x128xf32> -> vector<64x128xf32>
    %c1_51 = arith.constant 1 : index
    %c0_52 = arith.constant 0 : index
    %c0_53 = arith.constant 0 : index
    %76 = vector.load %arg6[%c1_51, %c0_52, %c0_53] : memref<2x1x128xf32, #tpu.memory_space<vmem>>, vector<1x1x128xf32>
    %77 = vector.shape_cast %76 : vector<1x1x128xf32> to vector<1x128xf32>
    %78 = vector.broadcast %77 : vector<1x128xf32> to vector<64x128xf32>
    %79 = arith.addf %75, %78 : vector<64x128xf32>
    %cst_54 = arith.constant 0.000000e+00 : f32
    %80 = vector.broadcast %cst_54 : f32 to vector<64x128xf32>
    %81 = arith.maximumf %79, %80 : vector<64x128xf32>
    %82 = arith.truncf %81 : vector<64x128xf32> to vector<64x128xbf16>
    %cst_55 = arith.constant dense<0.000000e+00> : vector<64x128xf32>
    %83 = tpu.matmul %82, %9, %cst_55 {dimension_numbers = #tpu.dot_dimension_numbers<[1], [0], [0], [1], [0, 0, 1, 1], [], []>} : vector<64x128xbf16>, vector<128x128xbf16>, vector<64x128xf32> -> vector<64x128xf32>
    %c1_56 = arith.constant 1 : index
    %c0_57 = arith.constant 0 : index
    %c0_58 = arith.constant 0 : index
    %84 = vector.load %arg7[%c1_56, %c0_57, %c0_58] : memref<2x64x64xbf16, #tpu.memory_space<vmem>>, vector<1x64x64xbf16>
    %85 = vector.shape_cast %84 : vector<1x64x64xbf16> to vector<64x64xbf16>
    %86 = arith.truncf %83 : vector<64x128xf32> to vector<64x128xbf16>
    %cst_59 = arith.constant dense<0.000000e+00> : vector<64x128xf32>
    %87 = tpu.matmul %85, %86, %cst_59 {dimension_numbers = #tpu.dot_dimension_numbers<[1], [0], [0], [1], [0, 0, 1, 1], [], []>} : vector<64x64xbf16>, vector<64x128xbf16>, vector<64x128xf32> -> vector<64x128xf32>
    %c1_60 = arith.constant 1 : index
    %c0_61 = arith.constant 0 : index
    %c0_62 = arith.constant 0 : index
    %88 = vector.load %arg8[%c1_60, %c0_61, %c0_62] : memref<2x64x1xf32, #tpu.memory_space<vmem>>, vector<1x64x1xf32>
    %89 = vector.shape_cast %88 : vector<1x64x1xf32> to vector<64x1xf32>
    %90 = vector.broadcast %89 : vector<64x1xf32> to vector<64x128xf32>
    %91 = arith.addf %87, %90 : vector<64x128xf32>
    %cst_63 = arith.constant 0.000000e+00 : f32
    %92 = vector.broadcast %cst_63 : f32 to vector<64x128xf32>
    %93 = arith.maximumf %91, %92 : vector<64x128xf32>
    %c1_64 = arith.constant 1 : index
    %c0_65 = arith.constant 0 : index
    %c0_66 = arith.constant 0 : index
    %94 = vector.load %arg9[%c1_64, %c0_65, %c0_66] : memref<2x128x64xbf16, #tpu.memory_space<vmem>>, vector<1x128x64xbf16>
    %95 = vector.shape_cast %94 : vector<1x128x64xbf16> to vector<128x64xbf16>
    %96 = arith.truncf %93 : vector<64x128xf32> to vector<64x128xbf16>
    %cst_67 = arith.constant dense<0.000000e+00> : vector<128x128xf32>
    %97 = tpu.matmul %95, %96, %cst_67 {dimension_numbers = #tpu.dot_dimension_numbers<[1], [0], [0], [1], [0, 0, 1, 1], [], []>} : vector<128x64xbf16>, vector<64x128xbf16>, vector<128x128xf32> -> vector<128x128xf32>
    %c1_68 = arith.constant 1 : index
    %c0_69 = arith.constant 0 : index
    %c0_70 = arith.constant 0 : index
    %98 = vector.load %arg10[%c1_68, %c0_69, %c0_70] : memref<2x128x1xf32, #tpu.memory_space<vmem>>, vector<1x128x1xf32>
    %99 = vector.shape_cast %98 : vector<1x128x1xf32> to vector<128x1xf32>
    %100 = vector.broadcast %99 : vector<128x1xf32> to vector<128x128xf32>
    %101 = arith.addf %97, %100 : vector<128x128xf32>
    %102 = vector.extract_strided_slice %101 {offsets = [0, 0], sizes = [64, 128], strides = [1, 1]} : vector<128x128xf32> to vector<64x128xf32>
    %103 = arith.negf %102 : vector<64x128xf32>
    %104 = math.exp %103 : vector<64x128xf32>
    %cst_71 = arith.constant 1.000000e+00 : f32
    %105 = vector.broadcast %cst_71 : f32 to vector<64x128xf32>
    %106 = arith.addf %105, %104 : vector<64x128xf32>
    %107 = arith.divf %105, %106 : vector<64x128xf32>
    %108 = vector.extract_strided_slice %101 {offsets = [64, 0], sizes = [64, 128], strides = [1, 1]} : vector<128x128xf32> to vector<64x128xf32>
    %109 = math.tanh %108 : vector<64x128xf32>
    %110 = arith.mulf %107, %109 : vector<64x128xf32>
    %c1_72 = arith.constant 1 : index
    %c0_73 = arith.constant 0 : index
    %c0_74 = arith.constant 0 : index
    %111 = vector.load %arg11[%c1_72, %c0_73, %c0_74] : memref<2x128x64xbf16, #tpu.memory_space<vmem>>, vector<1x128x64xbf16>
    %112 = vector.shape_cast %111 : vector<1x128x64xbf16> to vector<128x64xbf16>
    %113 = arith.truncf %110 : vector<64x128xf32> to vector<64x128xbf16>
    %cst_75 = arith.constant dense<0.000000e+00> : vector<128x128xf32>
    %114 = tpu.matmul %112, %113, %cst_75 {dimension_numbers = #tpu.dot_dimension_numbers<[1], [0], [0], [1], [0, 0, 1, 1], [], []>} : vector<128x64xbf16>, vector<64x128xbf16>, vector<128x128xf32> -> vector<128x128xf32>
    %c1_76 = arith.constant 1 : index
    %c0_77 = arith.constant 0 : index
    %c0_78 = arith.constant 0 : index
    %115 = vector.load %arg12[%c1_76, %c0_77, %c0_78] : memref<2x128x1xf32, #tpu.memory_space<vmem>>, vector<1x128x1xf32>
    %116 = vector.shape_cast %115 : vector<1x128x1xf32> to vector<128x1xf32>
    %117 = vector.broadcast %116 : vector<128x1xf32> to vector<128x128xf32>
    %118 = arith.addf %114, %117 : vector<128x128xf32>
    %119 = vector.extract_strided_slice %118 {offsets = [64, 0], sizes = [64, 128], strides = [1, 1]} : vector<128x128xf32> to vector<64x128xf32>
    %120 = arith.addf %67, %119 : vector<64x128xf32>
    %c0_79 = arith.constant 0 : index
    %c0_80 = arith.constant 0 : index
    %121 = vector.load %arg13[%c0_79, %c0_80] : memref<64x64xbf16, #tpu.memory_space<vmem>>, vector<64x64xbf16>
    %122 = arith.truncf %120 : vector<64x128xf32> to vector<64x128xbf16>
    %cst_81 = arith.constant dense<0.000000e+00> : vector<64x128xf32>
    %123 = tpu.matmul %121, %122, %cst_81 {dimension_numbers = #tpu.dot_dimension_numbers<[1], [0], [0], [1], [0, 0, 1, 1], [], []>} : vector<64x64xbf16>, vector<64x128xbf16>, vector<64x128xf32> -> vector<64x128xf32>
    %c0_82 = arith.constant 0 : index
    %c0_83 = arith.constant 0 : index
    %124 = vector.load %arg14[%c0_82, %c0_83] : memref<64x1xf32, #tpu.memory_space<vmem>>, vector<64x1xf32>
    %125 = vector.broadcast %124 : vector<64x1xf32> to vector<64x128xf32>
    %126 = arith.addf %123, %125 : vector<64x128xf32>
    %cst_84 = arith.constant 0.000000e+00 : f32
    %127 = vector.broadcast %cst_84 : f32 to vector<64x128xf32>
    %128 = arith.maximumf %126, %127 : vector<64x128xf32>
    %c0_85 = arith.constant 0 : index
    %c0_86 = arith.constant 0 : index
    %129 = vector.load %arg15[%c0_85, %c0_86] : memref<6x64xbf16, #tpu.memory_space<vmem>>, vector<6x64xbf16>
    %130 = arith.truncf %128 : vector<64x128xf32> to vector<64x128xbf16>
    %cst_87 = arith.constant dense<0.000000e+00> : vector<6x128xf32>
    %131 = tpu.matmul %129, %130, %cst_87 {dimension_numbers = #tpu.dot_dimension_numbers<[1], [0], [0], [1], [0, 0, 1, 1], [], []>} : vector<6x64xbf16>, vector<64x128xbf16>, vector<6x128xf32> -> vector<6x128xf32>
    %c0_88 = arith.constant 0 : index
    %c0_89 = arith.constant 0 : index
    %132 = vector.load %arg16[%c0_88, %c0_89] : memref<6x1xf32, #tpu.memory_space<vmem>>, vector<6x1xf32>
    %133 = vector.broadcast %132 : vector<6x1xf32> to vector<6x128xf32>
    %134 = arith.addf %131, %133 : vector<6x128xf32>
    %c0_90 = arith.constant 0 : index
    %c0_91 = arith.constant 0 : index
    %135 = vector.load %arg17[%c0_90, %c0_91] : memref<6x128xf32, #tpu.memory_space<vmem>>, vector<6x128xf32>
    tpu.vector_store %arg17[%c0_90, %c0_91], %134 {strides = array<i32>} : memref<6x128xf32, #tpu.memory_space<vmem>>, vector<6x128xf32>,
    return
  }
}

</mosaic_0001>

<llo_original>
// kernel: lift_ct_gcn_forward.1
$region0: #{lift_ct_gcn_forward.1}
  #allocation0 [shape = 'u32[]', space=smem, size = 0x4, offset = 0x4, fixed_abs, tag = 'smem constant byte address 0x4 - core index']
  #allocation1 [shape = 'u32[144,128]{1,0:T(1,128)}', space=vmem, size = 0x12000, scoped, tag = 'internal scratch']
  %s0 = inlined_call_operand.vmem [shape: f32[10,128], index: 0, kind: input, shape index: {}]
  %s1 = inlined_call_operand.vmem [shape: f32[2,64,1], index: 1, kind: input, shape index: {}]
  %s2 = inlined_call_operand.vmem [shape: bf16[64,10], index: 2, kind: input, shape index: {}]
  %s3 = inlined_call_operand.vmem [shape: f32[64,1], index: 3, kind: input, shape index: {}]
  %s4 = inlined_call_operand.vmem [shape: bf16[128,128], index: 4, kind: input, shape index: {}]
  %s5 = inlined_call_operand.vmem [shape: bf16[2,128,128], index: 5, kind: input, shape index: {}]
  %s6 = inlined_call_operand.vmem [shape: f32[2,1,128], index: 6, kind: input, shape index: {}]
  %s7 = inlined_call_operand.vmem [shape: bf16[2,64,64], index: 7, kind: input, shape index: {}]
  %s8 = inlined_call_operand.vmem [shape: f32[2,64,1], index: 8, kind: input, shape index: {}]
  %s9 = inlined_call_operand.vmem [shape: bf16[2,128,64], index: 9, kind: input, shape index: {}]
  %s10 = inlined_call_operand.vmem [shape: f32[2,128,1], index: 10, kind: input, shape index: {}]
  %s11 = inlined_call_operand.vmem [shape: bf16[2,128,64], index: 11, kind: input, shape index: {}]
  %s12 = inlined_call_operand.vmem [shape: f32[2,128,1], index: 12, kind: input, shape index: {}]
  %s13 = inlined_call_operand.vmem [shape: bf16[64,64], index: 13, kind: input, shape index: {}]
  %s14 = inlined_call_operand.vmem [shape: f32[64,1], index: 14, kind: input, shape index: {}]
  %s15 = inlined_call_operand.vmem [shape: bf16[6,64], index: 15, kind: input, shape index: {}]
  %s16 = inlined_call_operand.vmem [shape: f32[6,1], index: 16, kind: input, shape index: {}]
  %s17 = inlined_call_operand.vmem [shape: f32[6,128], index: 17, kind: output, shape index: {}]
  %s18 = sld [smem:[#allocation0]]
  $region78: #{lift_ct_gcn_forward.1} parent=0
    _
  %s20 = ssub.s32 1, %s18
  %s21 = scalar_select 0, %s20, %s18
  // Predicated region
  $region2: #{lift_ct_gcn_forward.1} parent=0 // pred_check
    _
  $region3: #{lift_ct_gcn_forward.1} parent=0 // pred_check_branch
    %23 = sbr.rel (0) target = $region5
  $region4: #{lift_ct_gcn_forward.1} parent=0 // pred_region
    _
  $region5: #{lift_ct_gcn_forward.1} parent=0 // pred_fallthru
    _
  // Predicated region
  $region6: #{lift_ct_gcn_forward.1} parent=0 // pred_check
    _
  $region7: #{lift_ct_gcn_forward.1} parent=0 // pred_check_branch
    %25 = sbr.rel (0) target = $region9
  $region8: #{lift_ct_gcn_forward.1} parent=0 // pred_region
    _
  $region9: #{lift_ct_gcn_forward.1} parent=0 // pred_fallthru
    _
  // Predicated region
  $region10: #{lift_ct_gcn_forward.1} parent=0 // pred_check
    _
  $region11: #{lift_ct_gcn_forward.1} parent=0 // pred_check_branch
    %27 = sbr.rel (0) target = $region13
  $region12: #{lift_ct_gcn_forward.1} parent=0 // pred_region
    _
  $region13: #{lift_ct_gcn_forward.1} parent=0 // pred_fallthru
    _
  // Predicated region
  $region14: #{lift_ct_gcn_forward.1} parent=0 // pred_check
    _
  $region15: #{lift_ct_gcn_forward.1} parent=0 // pred_check_branch
    %29 = sbr.rel (0) target = $region17
  $region16: #{lift_ct_gcn_forward.1} parent=0 // pred_region
    _
  $region17: #{lift_ct_gcn_forward.1} parent=0 // pred_fallthru
    _
  // Predicated region
  $region18: #{lift_ct_gcn_forward.1} parent=0 // pred_check
    _
  $region19: #{lift_ct_gcn_forward.1} parent=0 // pred_check_branch
    %31 = sbr.rel (0) target = $region21
  $region20: #{lift_ct_gcn_forward.1} parent=0 // pred_region
    _
  $region21: #{lift_ct_gcn_forward.1} parent=0 // pred_fallthru
    _
  // Predicated region
  $region22: #{lift_ct_gcn_forward.1} parent=0 // pred_check
    _
  $region23: #{lift_ct_gcn_forward.1} parent=0 // pred_check_branch
    %33 = sbr.rel (0) target = $region25
  $region24: #{lift_ct_gcn_forward.1} parent=0 // pred_region
    _
  $region25: #{lift_ct_gcn_forward.1} parent=0 // pred_fallthru
    _
  // Predicated region
  $region26: #{lift_ct_gcn_forward.1} parent=0 // pred_check
    _
  $region27: #{lift_ct_gcn_forward.1} parent=0 // pred_check_branch
    %35 = sbr.rel (0) target = $region29
  $region28: #{lift_ct_gcn_forward.1} parent=0 // pred_region
    _
  $region29: #{lift_ct_gcn_forward.1} parent=0 // pred_fallthru
    _
  // Predicated region
  $region30: #{lift_ct_gcn_forward.1} parent=0 // pred_check
    _
  $region31: #{lift_ct_gcn_forward.1} parent=0 // pred_check_branch
    %37 = sbr.rel (0) target = $region33
  $region32: #{lift_ct_gcn_forward.1} parent=0 // pred_region
    _
  $region33: #{lift_ct_gcn_forward.1} parent=0 // pred_fallthru
    _
  // Predicated region
  $region34: #{lift_ct_gcn_forward.1} parent=0 // pred_check
    _
  $region35: #{lift_ct_gcn_forward.1} parent=0 // pred_check_branch
    %39 = sbr.rel (0) target = $region37
  $region36: #{lift_ct_gcn_forward.1} parent=0 // pred_region
    _
  $region37: #{lift_ct_gcn_forward.1} parent=0 // pred_fallthru
    _
  // Predicated region
  $region38: #{lift_ct_gcn_forward.1} parent=0 // pred_check
    _
  $region39: #{lift_ct_gcn_forward.1} parent=0 // pred_check_branch
    %41 = sbr.rel (0) target = $region41
  $region40: #{lift_ct_gcn_forward.1} parent=0 // pred_region
    _
  $region41: #{lift_ct_gcn_forward.1} parent=0 // pred_fallthru
    _
  // Predicated region
  $region42: #{lift_ct_gcn_forward.1} parent=0 // pred_check
    _
  $region43: #{lift_ct_gcn_forward.1} parent=0 // pred_check_branch
    %43 = sbr.rel (0) target = $region45
  $region44: #{lift_ct_gcn_forward.1} parent=0 // pred_region
    _
  $region45: #{lift_ct_gcn_forward.1} parent=0 // pred_fallthru
    _
  // Predicated region
  $region46: #{lift_ct_gcn_forward.1} parent=0 // pred_check
    _
  $region47: #{lift_ct_gcn_forward.1} parent=0 // pred_check_branch
    %45 = sbr.rel (0) target = $region49
  $region48: #{lift_ct_gcn_forward.1} parent=0 // pred_region
    _
  $region49: #{lift_ct_gcn_forward.1} parent=0 // pred_fallthru
    _
  // Predicated region
  $region50: #{lift_ct_gcn_forward.1} parent=0 // pred_check
    _
  $region51: #{lift_ct_gcn_forward.1} parent=0 // pred_check_branch
    %47 = sbr.rel (0) target = $region53
  $region52: #{lift_ct_gcn_forward.1} parent=0 // pred_region
    _
  $region53: #{lift_ct_gcn_forward.1} parent=0 // pred_fallthru
    _
  // Predicated region
  $region54: #{lift_ct_gcn_forward.1} parent=0 // pred_check
    _
  $region55: #{lift_ct_gcn_forward.1} parent=0 // pred_check_branch
    %49 = sbr.rel (0) target = $region57
  $region56: #{lift_ct_gcn_forward.1} parent=0 // pred_region
    _
  $region57: #{lift_ct_gcn_forward.1} parent=0 // pred_fallthru
    _
  // Predicated region
  $region58: #{lift_ct_gcn_forward.1} parent=0 // pred_check
    _
  $region59: #{lift_ct_gcn_forward.1} parent=0 // pred_check_branch
    %51 = sbr.rel (0) target = $region61
  $region60: #{lift_ct_gcn_forward.1} parent=0 // pred_region
    _
  $region61: #{lift_ct_gcn_forward.1} parent=0 // pred_fallthru
    _
  // Predicated region
  $region62: #{lift_ct_gcn_forward.1} parent=0 // pred_check
    _
  $region63: #{lift_ct_gcn_forward.1} parent=0 // pred_check_branch
    %53 = sbr.rel (0) target = $region65
  $region64: #{lift_ct_gcn_forward.1} parent=0 // pred_region
    _
  $region65: #{lift_ct_gcn_forward.1} parent=0 // pred_fallthru
    _
  // Predicated region
  $region66: #{lift_ct_gcn_forward.1} parent=0 // pred_check
    _
  $region67: #{lift_ct_gcn_forward.1} parent=0 // pred_check_branch
    %55 = sbr.rel (0) target = $region69
  $region68: #{lift_ct_gcn_forward.1} parent=0 // pred_region
    _
  $region69: #{lift_ct_gcn_forward.1} parent=0 // pred_fallthru
    _
  %v57 = vld [vmem:[%s2] sm:$0xf]
  %v58 = vld [vmem:[%s2 + $0x4] sm:$0xf]
  %v59 = vld [vmem:[%s2 + $0x8] sm:$0xf]
  %v60 = vld [vmem:[%s2 + $0xc] sm:$0xf]
  %v61 = vld [vmem:[%s2 + $0x10] sm:$0xf]
  %v62 = vld [vmem:[%s2 + $0x14] sm:$0xf]
  %v63 = vld [vmem:[%s2 + $0x18] sm:$0xf]
  %v64 = vld [vmem:[%s2 + $0x1c] sm:$0xf]
  %v65 = vld [vmem:[%s0] sm:$0xff]
  %v66 = vld [vmem:[%s0 + $0x8] sm:$0x3]
  %v67 = vpack.c.bf16 %v66, %v65
  %v68 = vld [vmem:[%s3] sm:$0xff]
  %v69 = vld [vmem:[%s3 + $0x8] sm:$0xff]
  %v70 = vld [vmem:[%s3 + $0x10] sm:$0xff]
  %v71 = vld [vmem:[%s3 + $0x18] sm:$0xff]
  %v72 = vld [vmem:[%s3 + $0x20] sm:$0xff]
  %v73 = vld [vmem:[%s3 + $0x28] sm:$0xff]
  %v74 = vld [vmem:[%s3 + $0x30] sm:$0xff]
  %v75 = vld [vmem:[%s3 + $0x38] sm:$0xff]
  %77 = vset.pattern.permute.xlu0 0
  %78 = vperm.xlu0 %77, %v68
  %v79 = vpop.permute.xlu0 %78
  %82 = vset.pattern.permute.xlu0 0
  %83 = vperm.xlu0 %82, %v69
  %v84 = vpop.permute.xlu0 %83
  %87 = vset.pattern.permute.xlu0 0
  %88 = vperm.xlu0 %87, %v70
  %v89 = vpop.permute.xlu0 %88
  %92 = vset.pattern.permute.xlu0 0
  %93 = vperm.xlu0 %92, %v71
  %v94 = vpop.permute.xlu0 %93
  %97 = vset.pattern.permute.xlu0 0
  %98 = vperm.xlu0 %97, %v72
  %v99 = vpop.permute.xlu0 %98
  %102 = vset.pattern.permute.xlu0 0
  %103 = vperm.xlu0 %102, %v73
  %v104 = vpop.permute.xlu0 %103
  %107 = vset.pattern.permute.xlu0 0
  %108 = vperm.xlu0 %107, %v74
  %v109 = vpop.permute.xlu0 %108
  %112 = vset.pattern.permute.xlu0 0
  %113 = vperm.xlu0 %112, %v75
  %v114 = vpop.permute.xlu0 %113
  %v124 = vunpack.c.l.b16 %v57
  %v125 = vunpack.c.l.b16 %v58
  %v126 = vunpack.c.l.b16 %v59
  %v127 = vunpack.c.l.b16 %v60
  %v128 = vunpack.c.l.b16 %v61
  %v129 = vunpack.c.l.b16 %v62
  %v130 = vunpack.c.l.b16 %v63
  %v131 = vunpack.c.l.b16 %v64
  %v132 = vpack.c.b16 %v125, %v124
  %v133 = vpack.c.b16 %v127, %v126
  %v134 = vpack.c.b16 %v129, %v128
  %v135 = vpack.c.b16 %v131, %v130
  %vm136 = vcmask 80896
  %v138 = vsel %vm136, %v132, 0
  %v141 = vsel %vm136, %v133, 0
  %v144 = vsel %vm136, %v134, 0
  %v147 = vsel %vm136, %v135, 0
  %vm149 = vcmask 1044480
  %v151 = vsel %vm149, %v67, 0
  %153 = vmatprep.subr.bf16.mxu0 0
  %154 = vmatpush1.bf16.msra.mxu0 %v151
  %155 = vmatprep.subr.bf16.mxu0 0
  %156 = vmatpush1.bf16.msra.mxu0 0
  %157 = vmatprep.subr.bf16.mxu0 0
  %158 = vmatpush1.bf16.msra.mxu0 0
  %159 = vmatprep.subr.bf16.mxu0 0
  %160 = vmatpush1.bf16.msra.mxu0 0
  %161 = vmatprep.subr.bf16.mxu0 0
  %162 = vmatpush1.bf16.msra.mxu0 0
  %163 = vmatprep.subr.bf16.mxu0 0
  %164 = vmatpush1.bf16.msra.mxu0 0
  %165 = vmatprep.subr.bf16.mxu0 0
  %166 = vmatpush1.bf16.msra.mxu0 0
  %167 = vmatprep.subr.bf16.mxu0 0
  %168 = vmatpush1.bf16.msra.mxu0 0
  %169 = vmatprep.subr.bf16.mxu0 0
  %170 = vmatpush1.bf16.msra.mxu0 0
  %171 = vmatprep.subr.bf16.mxu0 0
  %172 = vmatpush1.bf16.msra.mxu0 0
  %173 = vmatprep.subr.bf16.mxu0 0
  %174 = vmatpush1.bf16.msra.mxu0 0
  %175 = vmatprep.subr.bf16.mxu0 0
  %176 = vmatpush1.bf16.msra.mxu0 0
  %177 = vmatprep.subr.bf16.mxu0 0
  %178 = vmatpush1.bf16.msra.mxu0 0
  %179 = vmatprep.subr.bf16.mxu0 0
  %180 = vmatpush1.bf16.msra.mxu0 0
  %181 = vmatprep.subr.bf16.mxu0 0
  %182 = vmatpush1.bf16.msra.mxu0 0
  %183 = vmatprep.subr.bf16.mxu0 0
  %184 = vmatpush1.bf16.msra.mxu0 0
  %185 = vmatprep.mubr.bf16.mxu0 0
  %186 = vmatmul.mubr.bf16.gmra.mrb[0].mxu0 %v138
  %v187 = vpop.f32.mrb[0].mxu0
  %v188 = vadd.f32 %v79, %v187
  %v189 = vpop.f32.mrb[0].mxu0
  %v190 = vpop.f32.mrb[0].mxu0
  %v191 = vadd.f32 %v84, %v190
  %v192 = vpop.f32.mrb[0].mxu0
  %193 = vmatprep.mubr.bf16.mxu0 0
  %194 = vmatmul.mubr.bf16.gmra.mrb[0].mxu0 %v141
  %v195 = vpop.f32.mrb[0].mxu0
  %v196 = vadd.f32 %v89, %v195
  %v197 = vpop.f32.mrb[0].mxu0
  %v198 = vpop.f32.mrb[0].mxu0
  %v199 = vadd.f32 %v94, %v198
  %v200 = vpop.f32.mrb[0].mxu0
  %201 = vmatprep.mubr.bf16.mxu0 0
  %202 = vmatmul.mubr.bf16.gmra.mrb[0].mxu0 %v144
  %v203 = vpop.f32.mrb[0].mxu0
  %v204 = vadd.f32 %v99, %v203
  %v205 = vpop.f32.mrb[0].mxu0
  %v206 = vpop.f32.mrb[0].mxu0
  %v207 = vadd.f32 %v104, %v206
  %v208 = vpop.f32.mrb[0].mxu0
  %209 = vmatprep.mubr.bf16.mxu0 0
  %210 = vmatmul.mubr.bf16.gmra.mrb[0].mxu0 %v147
  %v211 = vpop.f32.mrb[0].mxu0
  %v212 = vadd.f32 %v109, %v211
  %v213 = vpop.f32.mrb[0].mxu0
  %v214 = vpop.f32.mrb[0].mxu0
  %v215 = vadd.f32 %v114, %v214
  %v216 = vpop.f32.mrb[0].mxu0
  %217 = vdwg.mxu0
  %v218 = vmax.f32 %v188, 0.0
  %v219 = vmax.f32 %v191, 0.0
  %v220 = vmax.f32 %v196, 0.0
  %v221 = vmax.f32 %v199, 0.0
  %v222 = vmax.f32 %v204, 0.0
  %v223 = vmax.f32 %v207, 0.0
  %v224 = vmax.f32 %v212, 0.0
  %v225 = vmax.f32 %v215, 0.0
  %v226 = vld [vmem:[%s4] sm:$0xf]
  %v227 = vld [vmem:[%s4 + $0x4] sm:$0xf]
  %v228 = vld [vmem:[%s4 + $0x8] sm:$0xf]
  %v229 = vld [vmem:[%s4 + $0xc] sm:$0xf]
  %v230 = vld [vmem:[%s4 + $0x10] sm:$0xf]
  %v231 = vld [vmem:[%s4 + $0x14] sm:$0xf]
  %v232 = vld [vmem:[%s4 + $0x18] sm:$0xf]
  %v233 = vld [vmem:[%s4 + $0x1c] sm:$0xf]
  %v234 = vld [vmem:[%s4 + $0x20] sm:$0xf]
  %v235 = vld [vmem:[%s4 + $0x24] sm:$0xf]
  %v236 = vld [vmem:[%s4 + $0x28] sm:$0xf]
  %v237 = vld [vmem:[%s4 + $0x2c] sm:$0xf]
  %v238 = vld [vmem:[%s4 + $0x30] sm:$0xf]
  %v239 = vld [vmem:[%s4 + $0x34] sm:$0xf]
  %v240 = vld [vmem:[%s4 + $0x38] sm:$0xf]
  %v241 = vld [vmem:[%s4 + $0x3c] sm:$0xf]
  %v242 = vld [vmem:[%s1] sm:$0xff]
  %v243 = vld [vmem:[%s1 + $0x8] sm:$0xff]
  %v244 = vld [vmem:[%s1 + $0x10] sm:$0xff]
  %v245 = vld [vmem:[%s1 + $0x18] sm:$0xff]
  %v246 = vld [vmem:[%s1 + $0x20] sm:$0xff]
  %v247 = vld [vmem:[%s1 + $0x28] sm:$0xff]
  %v248 = vld [vmem:[%s1 + $0x30] sm:$0xff]
  %v249 = vld [vmem:[%s1 + $0x38] sm:$0xff]
  %251 = vset.pattern.permute.xlu0 0
  %252 = vperm.xlu0 %251, %v242
  %v253 = vpop.permute.xlu0 %252
  %256 = vset.pattern.permute.xlu0 0
  %257 = vperm.xlu0 %256, %v243
  %v258 = vpop.permute.xlu0 %257
  %261 = vset.pattern.permute.xlu0 0
  %262 = vperm.xlu0 %261, %v244
  %v263 = vpop.permute.xlu0 %262
  %266 = vset.pattern.permute.xlu0 0
  %267 = vperm.xlu0 %266, %v245
  %v268 = vpop.permute.xlu0 %267
  %271 = vset.pattern.permute.xlu0 0
  %272 = vperm.xlu0 %271, %v246
  %v273 = vpop.permute.xlu0 %272
  %276 = vset.pattern.permute.xlu0 0
  %277 = vperm.xlu0 %276, %v247
  %v278 = vpop.permute.xlu0 %277
  %281 = vset.pattern.permute.xlu0 0
  %282 = vperm.xlu0 %281, %v248
  %v283 = vpop.permute.xlu0 %282
  %286 = vset.pattern.permute.xlu0 0
  %287 = vperm.xlu0 %286, %v249
  %v288 = vpop.permute.xlu0 %287
  %v290 = vadd.f32 %v218, %v253
  %v291 = vadd.f32 %v219, %v258
  %v292 = vadd.f32 %v220, %v263
  %v293 = vadd.f32 %v221, %v268
  %v294 = vadd.f32 %v222, %v273
  %v295 = vadd.f32 %v223, %v278
  %v296 = vadd.f32 %v224, %v283
  %v297 = vadd.f32 %v225, %v288
  %v298 = vld [vmem:[%s5] sm:$0xf]
  %v299 = vld [vmem:[%s5 + $0x4] sm:$0xf]
  %v300 = vld [vmem:[%s5 + $0x8] sm:$0xf]
  %v301 = vld [vmem:[%s5 + $0xc] sm:$0xf]
  %v302 = vld [vmem:[%s5 + $0x10] sm:$0xf]
  %v303 = vld [vmem:[%s5 + $0x14] sm:$0xf]
  %v304 = vld [vmem:[%s5 + $0x18] sm:$0xf]
  %v305 = vld [vmem:[%s5 + $0x1c] sm:$0xf]
  %v306 = vld [vmem:[%s5 + $0x20] sm:$0xf]
  %v307 = vld [vmem:[%s5 + $0x24] sm:$0xf]
  %v308 = vld [vmem:[%s5 + $0x28] sm:$0xf]
  %v309 = vld [vmem:[%s5 + $0x2c] sm:$0xf]
  %v310 = vld [vmem:[%s5 + $0x30] sm:$0xf]
  %v311 = vld [vmem:[%s5 + $0x34] sm:$0xf]
  %v312 = vld [vmem:[%s5 + $0x38] sm:$0xf]
  %v313 = vld [vmem:[%s5 + $0x3c] sm:$0xf]
  %v314 = vpack.c.bf16 %v291, %v290
  %v315 = vpack.c.bf16 %v293, %v292
  %v316 = vpack.c.bf16 %v295, %v294
  %v317 = vpack.c.bf16 %v297, %v296
  %v318 = vld [vmem:[%s6] sm:$0x1]
  %v320 = vlaneseq
  %v321 = vshrl.u32 %v320, 7
  %v322 = vsub.s32 0, %v321
  %v323 = vrot.slane %v318, %v322
  %v341 = vunpack.c.l.b16 %v298
  %v342 = vunpack.c.l.b16 %v299
  %v343 = vunpack.c.l.b16 %v300
  %v344 = vunpack.c.l.b16 %v301
  %v345 = vunpack.c.l.b16 %v302
  %v346 = vunpack.c.l.b16 %v303
  %v347 = vunpack.c.l.b16 %v304
  %v348 = vunpack.c.l.b16 %v305
  %v349 = vunpack.c.l.b16 %v306
  %v350 = vunpack.c.l.b16 %v307
  %v351 = vunpack.c.l.b16 %v308
  %v352 = vunpack.c.l.b16 %v309
  %v353 = vunpack.c.l.b16 %v310
  %v354 = vunpack.c.l.b16 %v311
  %v355 = vunpack.c.l.b16 %v312
  %v356 = vunpack.c.l.b16 %v313
  %v357 = vpack.c.b16 %v342, %v341
  %v358 = vpack.c.b16 %v344, %v343
  %v359 = vpack.c.b16 %v346, %v345
  %v360 = vpack.c.b16 %v348, %v347
  %v361 = vpack.c.b16 %v350, %v349
  %v362 = vpack.c.b16 %v352, %v351
  %v363 = vpack.c.b16 %v354, %v353
  %v364 = vpack.c.b16 %v356, %v355
  %373 = vmatprep.subr.bf16.mxu0 0
  %374 = vmatpush1.bf16.msra.mxu0 %v357
  %375 = vmatprep.subr.bf16.mxu0 0
  %376 = vmatpush1.bf16.msra.mxu0 %v358
  %377 = vmatprep.subr.bf16.mxu0 0
  %378 = vmatpush1.bf16.msra.mxu0 %v359
  %379 = vmatprep.subr.bf16.mxu0 0
  %380 = vmatpush1.bf16.msra.mxu0 %v360
  %381 = vmatprep.subr.bf16.mxu0 0
  %382 = vmatpush1.bf16.msra.mxu0 %v361
  %383 = vmatprep.subr.bf16.mxu0 0
  %384 = vmatpush1.bf16.msra.mxu0 %v362
  %385 = vmatprep.subr.bf16.mxu0 0
  %386 = vmatpush1.bf16.msra.mxu0 %v363
  %387 = vmatprep.subr.bf16.mxu0 0
  %388 = vmatpush1.bf16.msra.mxu0 %v364
  %389 = vmatprep.subr.bf16.mxu0 0
  %390 = vmatpush1.bf16.msra.mxu0 0
  %391 = vmatprep.subr.bf16.mxu0 0
  %392 = vmatpush1.bf16.msra.mxu0 0
  %393 = vmatprep.subr.bf16.mxu0 0
  %394 = vmatpush1.bf16.msra.mxu0 0
  %395 = vmatprep.subr.bf16.mxu0 0
  %396 = vmatpush1.bf16.msra.mxu0 0
  %397 = vmatprep.subr.bf16.mxu0 0
  %398 = vmatpush1.bf16.msra.mxu0 0
  %399 = vmatprep.subr.bf16.mxu0 0
  %400 = vmatpush1.bf16.msra.mxu0 0
  %401 = vmatprep.subr.bf16.mxu0 0
  %402 = vmatpush1.bf16.msra.mxu0 0
  %403 = vmatprep.subr.bf16.mxu0 0
  %404 = vmatpush1.bf16.msra.mxu0 0
  %405 = vmatprep.mubr.bf16.mxu0 0
  %406 = vmatmul.mubr.bf16.gmra.mrb[0].mxu0 %v314
  %v407 = vpop.f32.mrb[0].mxu0
  %v408 = vadd.f32 %v323, %v407
  %v409 = vpop.f32.mrb[0].mxu0
  %v410 = vpop.f32.mrb[0].mxu0
  %v411 = vadd.f32 %v323, %v410
  %v412 = vpop.f32.mrb[0].mxu0
  %413 = vmatprep.mubr.bf16.mxu0 0
  %414 = vmatmul.mubr.bf16.gmra.mrb[0].mxu0 %v315
  %v415 = vpop.f32.mrb[0].mxu0
  %v416 = vadd.f32 %v323, %v415
  %v417 = vpop.f32.mrb[0].mxu0
  %v418 = vpop.f32.mrb[0].mxu0
  %v419 = vadd.f32 %v323, %v418
  %v420 = vpop.f32.mrb[0].mxu0
  %421 = vmatprep.mubr.bf16.mxu0 0
  %422 = vmatmul.mubr.bf16.gmra.mrb[0].mxu0 %v316
  %v423 = vpop.f32.mrb[0].mxu0
  %v424 = vadd.f32 %v323, %v423
  %v425 = vpop.f32.mrb[0].mxu0
  %v426 = vpop.f32.mrb[0].mxu0
  %v427 = vadd.f32 %v323, %v426
  %v428 = vpop.f32.mrb[0].mxu0
  %429 = vmatprep.mubr.bf16.mxu0 0
  %430 = vmatmul.mubr.bf16.gmra.mrb[0].mxu0 %v317
  %v431 = vpop.f32.mrb[0].mxu0
  %v432 = vadd.f32 %v323, %v431
  %v433 = vpop.f32.mrb[0].mxu0
  %v434 = vpop.f32.mrb[0].mxu0
  %v435 = vadd.f32 %v323, %v434
  %v436 = vpop.f32.mrb[0].mxu0
  %437 = vdwg.mxu0
  %v438 = vmax.f32 %v408, 0.0
  %v439 = vmax.f32 %v411, 0.0
  %v440 = vmax.f32 %v416, 0.0
  %v441 = vmax.f32 %v419, 0.0
  %v442 = vmax.f32 %v424, 0.0
  %v443 = vmax.f32 %v427, 0.0
  %v444 = vmax.f32 %v432, 0.0
  %v445 = vmax.f32 %v435, 0.0
  %v446 = vpack.c.bf16 %v439, %v438
  %v447 = vpack.c.bf16 %v441, %v440
  %v448 = vpack.c.bf16 %v443, %v442
  %v449 = vpack.c.bf16 %v445, %v444
  %v466 = vunpack.c.l.b16 %v226
  %v467 = vunpack.c.l.b16 %v227
  %v468 = vunpack.c.l.b16 %v228
  %v469 = vunpack.c.l.b16 %v229
  %v470 = vunpack.c.l.b16 %v230
  %v471 = vunpack.c.l.b16 %v231
  %v472 = vunpack.c.l.b16 %v232
  %v473 = vunpack.c.l.b16 %v233
  %v474 = vunpack.c.l.b16 %v234
  %v475 = vunpack.c.l.b16 %v235
  %v476 = vunpack.c.l.b16 %v236
  %v477 = vunpack.c.l.b16 %v237
  %v478 = vunpack.c.l.b16 %v238
  %v479 = vunpack.c.l.b16 %v239
  %v480 = vunpack.c.l.b16 %v240
  %v481 = vunpack.c.l.b16 %v241
  %v482 = vpack.c.b16 %v467, %v466
  %v483 = vpack.c.b16 %v469, %v468
  %v484 = vpack.c.b16 %v471, %v470
  %v485 = vpack.c.b16 %v473, %v472
  %v486 = vpack.c.b16 %v475, %v474
  %v487 = vpack.c.b16 %v477, %v476
  %v488 = vpack.c.b16 %v479, %v478
  %v489 = vpack.c.b16 %v481, %v480
  %498 = vmatprep.subr.bf16.mxu0 0
  %499 = vmatpush1.bf16.msra.mxu0 %v482
  %500 = vmatprep.subr.bf16.mxu0 0
  %501 = vmatpush1.bf16.msra.mxu0 %v483
  %502 = vmatprep.subr.bf16.mxu0 0
  %503 = vmatpush1.bf16.msra.mxu0 %v484
  %504 = vmatprep.subr.bf16.mxu0 0
  %505 = vmatpush1.bf16.msra.mxu0 %v485
  %506 = vmatprep.subr.bf16.mxu0 0
  %507 = vmatpush1.bf16.msra.mxu0 %v486
  %508 = vmatprep.subr.bf16.mxu0 0
  %509 = vmatpush1.bf16.msra.mxu0 %v487
  %510 = vmatprep.subr.bf16.mxu0 0
  %511 = vmatpush1.bf16.msra.mxu0 %v488
  %512 = vmatprep.subr.bf16.mxu0 0
  %513 = vmatpush1.bf16.msra.mxu0 %v489
  %514 = vmatprep.subr.bf16.mxu0 0
  %515 = vmatpush1.bf16.msra.mxu0 0
  %516 = vmatprep.subr.bf16.mxu0 0
  %517 = vmatpush1.bf16.msra.mxu0 0
  %518 = vmatprep.subr.bf16.mxu0 0
  %519 = vmatpush1.bf16.msra.mxu0 0
  %520 = vmatprep.subr.bf16.mxu0 0
  %521 = vmatpush1.bf16.msra.mxu0 0
  %522 = vmatprep.subr.bf16.mxu0 0
  %523 = vmatpush1.bf16.msra.mxu0 0
  %524 = vmatprep.subr.bf16.mxu0 0
  %525 = vmatpush1.bf16.msra.mxu0 0
  %526 = vmatprep.subr.bf16.mxu0 0
  %527 = vmatpush1.bf16.msra.mxu0 0
  %528 = vmatprep.subr.bf16.mxu0 0
  %529 = vmatpush1.bf16.msra.mxu0 0
  %530 = vmatprep.mubr.bf16.mxu0 0
  %531 = vmatmul.mubr.bf16.gmra.mrb[0].mxu0 %v446
  %v532 = vpop.f32.mrb[0].mxu0
  %v533 = vadd.f32 0.0, %v532
  %v534 = vpop.f32.mrb[0].mxu0
  %v535 = vpop.f32.mrb[0].mxu0
  %v536 = vadd.f32 0.0, %v535
  %v537 = vpop.f32.mrb[0].mxu0
  %538 = vmatprep.mubr.bf16.mxu0 0
  %539 = vmatmul.mubr.bf16.gmra.mrb[0].mxu0 %v447
  %v540 = vpop.f32.mrb[0].mxu0
  %v541 = vadd.f32 0.0, %v540
  %v542 = vpop.f32.mrb[0].mxu0
  %v543 = vpop.f32.mrb[0].mxu0
  %v544 = vadd.f32 0.0, %v543
  %v545 = vpop.f32.mrb[0].mxu0
  %546 = vmatprep.mubr.bf16.mxu0 0
  %547 = vmatmul.mubr.bf16.gmra.mrb[0].mxu0 %v448
  %v548 = vpop.f32.mrb[0].mxu0
  %v549 = vadd.f32 0.0, %v548
  %v550 = vpop.f32.mrb[0].mxu0
  %v551 = vpop.f32.mrb[0].mxu0
  %v552 = vadd.f32 0.0, %v551
  %v553 = vpop.f32.mrb[0].mxu0
  %554 = vmatprep.mubr.bf16.mxu0 0
  %555 = vmatmul.mubr.bf16.gmra.mrb[0].mxu0 %v449
  %v556 = vpop.f32.mrb[0].mxu0
  %v557 = vadd.f32 0.0, %v556
  %v558 = vpop.f32.mrb[0].mxu0
  %v559 = vpop.f32.mrb[0].mxu0
  %v560 = vadd.f32 0.0, %v559
  %v561 = vpop.f32.mrb[0].mxu0
  %562 = vdwg.mxu0
  %v563 = vld [vmem:[%s7] sm:$0xf]
  %v564 = vld [vmem:[%s7 + $0x4] sm:$0xf]
  %v565 = vld [vmem:[%s7 + $0x8] sm:$0xf]
  %v566 = vld [vmem:[%s7 + $0xc] sm:$0xf]
  %v567 = vld [vmem:[%s7 + $0x10] sm:$0xf]
  %v568 = vld [vmem:[%s7 + $0x14] sm:$0xf]
  %v569 = vld [vmem:[%s7 + $0x18] sm:$0xf]
  %v570 = vld [vmem:[%s7 + $0x1c] sm:$0xf]
  %v571 = vpack.c.bf16 %v536, %v533
  %v572 = vpack.c.bf16 %v544, %v541
  %v573 = vpack.c.bf16 %v552, %v549
  %v574 = vpack.c.bf16 %v560, %v557
  %v575 = vld [vmem:[%s8] sm:$0xff]
  %v576 = vld [vmem:[%s8 + $0x8] sm:$0xff]
  %v577 = vld [vmem:[%s8 + $0x10] sm:$0xff]
  %v578 = vld [vmem:[%s8 + $0x18] sm:$0xff]
  %v579 = vld [vmem:[%s8 + $0x20] sm:$0xff]
  %v580 = vld [vmem:[%s8 + $0x28] sm:$0xff]
  %v581 = vld [vmem:[%s8 + $0x30] sm:$0xff]
  %v582 = vld [vmem:[%s8 + $0x38] sm:$0xff]
  %584 = vset.pattern.permute.xlu0 0
  %585 = vperm.xlu0 %584, %v575
  %v586 = vpop.permute.xlu0 %585
  %589 = vset.pattern.permute.xlu0 0
  %590 = vperm.xlu0 %589, %v576
  %v591 = vpop.permute.xlu0 %590
  %594 = vset.pattern.permute.xlu0 0
  %595 = vperm.xlu0 %594, %v577
  %v596 = vpop.permute.xlu0 %595
  %599 = vset.pattern.permute.xlu0 0
  %600 = vperm.xlu0 %599, %v578
  %v601 = vpop.permute.xlu0 %600
  %604 = vset.pattern.permute.xlu0 0
  %605 = vperm.xlu0 %604, %v579
  %v606 = vpop.permute.xlu0 %605
  %609 = vset.pattern.permute.xlu0 0
  %610 = vperm.xlu0 %609, %v580
  %v611 = vpop.permute.xlu0 %610
  %614 = vset.pattern.permute.xlu0 0
  %615 = vperm.xlu0 %614, %v581
  %v616 = vpop.permute.xlu0 %615
  %619 = vset.pattern.permute.xlu0 0
  %620 = vperm.xlu0 %619, %v582
  %v621 = vpop.permute.xlu0 %620
  %v631 = vunpack.c.l.b16 %v563
  %v632 = vunpack.c.l.b16 %v564
  %v633 = vunpack.c.l.b16 %v565
  %v634 = vunpack.c.l.b16 %v566
  %v635 = vunpack.c.l.b16 %v567
  %v636 = vunpack.c.l.b16 %v568
  %v637 = vunpack.c.l.b16 %v569
  %v638 = vunpack.c.l.b16 %v570
  %v639 = vpack.c.b16 %v632, %v631
  %v640 = vpack.c.b16 %v634, %v633
  %v641 = vpack.c.b16 %v636, %v635
  %v642 = vpack.c.b16 %v638, %v637
  %vm643 = vcmask 523264
  %v645 = vsel %vm643, %v639, 0
  %v648 = vsel %vm643, %v640, 0
  %v651 = vsel %vm643, %v641, 0
  %v654 = vsel %vm643, %v642, 0
  %656 = vmatprep.subr.bf16.mxu0 0
  %657 = vmatpush1.bf16.msra.mxu0 %v571
  %658 = vmatprep.subr.bf16.mxu0 0
  %659 = vmatpush1.bf16.msra.mxu0 %v572
  %660 = vmatprep.subr.bf16.mxu0 0
  %661 = vmatpush1.bf16.msra.mxu0 %v573
  %662 = vmatprep.subr.bf16.mxu0 0
  %663 = vmatpush1.bf16.msra.mxu0 %v574
  %664 = vmatprep.subr.bf16.mxu0 0
  %665 = vmatpush1.bf16.msra.mxu0 0
  %666 = vmatprep.subr.bf16.mxu0 0
  %667 = vmatpush1.bf16.msra.mxu0 0
  %668 = vmatprep.subr.bf16.mxu0 0
  %669 = vmatpush1.bf16.msra.mxu0 0
  %670 = vmatprep.subr.bf16.mxu0 0
  %671 = vmatpush1.bf16.msra.mxu0 0
  %672 = vmatprep.subr.bf16.mxu0 0
  %673 = vmatpush1.bf16.msra.mxu0 0
  %674 = vmatprep.subr.bf16.mxu0 0
  %675 = vmatpush1.bf16.msra.mxu0 0
  %676 = vmatprep.subr.bf16.mxu0 0
  %677 = vmatpush1.bf16.msra.mxu0 0
  %678 = vmatprep.subr.bf16.mxu0 0
  %679 = vmatpush1.bf16.msra.mxu0 0
  %680 = vmatprep.subr.bf16.mxu0 0
  %681 = vmatpush1.bf16.msra.mxu0 0
  %682 = vmatprep.subr.bf16.mxu0 0
  %683 = vmatpush1.bf16.msra.mxu0 0
  %684 = vmatprep.subr.bf16.mxu0 0
  %685 = vmatpush1.bf16.msra.mxu0 0
  %686 = vmatprep.subr.bf16.mxu0 0
  %687 = vmatpush1.bf16.msra.mxu0 0
  %688 = vmatprep.mubr.bf16.mxu0 0
  %689 = vmatmul.mubr.bf16.gmra.mrb[0].mxu0 %v645
  %v690 = vpop.f32.mrb[0].mxu0
  %v691 = vadd.f32 %v586, %v690
  %v692 = vpop.f32.mrb[0].mxu0
  %v693 = vpop.f32.mrb[0].mxu0
  %v694 = vadd.f32 %v591, %v693
  %v695 = vpop.f32.mrb[0].mxu0
  %696 = vmatprep.mubr.bf16.mxu0 0
  %697 = vmatmul.mubr.bf16.gmra.mrb[0].mxu0 %v648
  %v698 = vpop.f32.mrb[0].mxu0
  %v699 = vadd.f32 %v596, %v698
  %v700 = vpop.f32.mrb[0].mxu0
  %v701 = vpop.f32.mrb[0].mxu0
  %v702 = vadd.f32 %v601, %v701
  %v703 = vpop.f32.mrb[0].mxu0
  %704 = vmatprep.mubr.bf16.mxu0 0
  %705 = vmatmul.mubr.bf16.gmra.mrb[0].mxu0 %v651
  %v706 = vpop.f32.mrb[0].mxu0
  %v707 = vadd.f32 %v606, %v706
  %v708 = vpop.f32.mrb[0].mxu0
  %v709 = vpop.f32.mrb[0].mxu0
  %v710 = vadd.f32 %v611, %v709
  %v711 = vpop.f32.mrb[0].mxu0
  %712 = vmatprep.mubr.bf16.mxu0 0
  %713 = vmatmul.mubr.bf16.gmra.mrb[0].mxu0 %v654
  %v714 = vpop.f32.mrb[0].mxu0
  %v715 = vadd.f32 %v616, %v714
  %v716 = vpop.f32.mrb[0].mxu0
  %v717 = vpop.f32.mrb[0].mxu0
  %v718 = vadd.f32 %v621, %v717
  %v719 = vpop.f32.mrb[0].mxu0
  %720 = vdwg.mxu0
  %v721 = vmax.f32 %v691, 0.0
  %v722 = vmax.f32 %v694, 0.0
  %v723 = vmax.f32 %v699, 0.0
  %v724 = vmax.f32 %v702, 0.0
  %v725 = vmax.f32 %v707, 0.0
  %v726 = vmax.f32 %v710, 0.0
  %v727 = vmax.f32 %v715, 0.0
  %v728 = vmax.f32 %v718, 0.0
  %v729 = vld [vmem:[%s9] sm:$0xf]
  %v730 = vld [vmem:[%s9 + $0x4] sm:$0xf]
  %v731 = vld [vmem:[%s9 + $0x8] sm:$0xf]
  %v732 = vld [vmem:[%s9 + $0xc] sm:$0xf]
  %v733 = vld [vmem:[%s9 + $0x10] sm:$0xf]
  %v734 = vld [vmem:[%s9 + $0x14] sm:$0xf]
  %v735 = vld [vmem:[%s9 + $0x18] sm:$0xf]
  %v736 = vld [vmem:[%s9 + $0x1c] sm:$0xf]
  %v737 = vld [vmem:[%s9 + $0x20] sm:$0xf]
  %v738 = vld [vmem:[%s9 + $0x24] sm:$0xf]
  %v739 = vld [vmem:[%s9 + $0x28] sm:$0xf]
  %v740 = vld [vmem:[%s9 + $0x2c] sm:$0xf]
  %v741 = vld [vmem:[%s9 + $0x30] sm:$0xf]
  %v742 = vld [vmem:[%s9 + $0x34] sm:$0xf]
  %v743 = vld [vmem:[%s9 + $0x38] sm:$0xf]
  %v744 = vld [vmem:[%s9 + $0x3c] sm:$0xf]
  %v745 = vpack.c.bf16 %v722, %v721
  %v746 = vpack.c.bf16 %v724, %v723
  %v747 = vpack.c.bf16 %v726, %v725
  %v748 = vpack.c.bf16 %v728, %v727
  %v749 = vld [vmem:[%s10] sm:$0xff]
  %v750 = vld [vmem:[%s10 + $0x8] sm:$0xff]
  %v751 = vld [vmem:[%s10 + $0x10] sm:$0xff]
  %v752 = vld [vmem:[%s10 + $0x18] sm:$0xff]
  %v753 = vld [vmem:[%s10 + $0x20] sm:$0xff]
  %v754 = vld [vmem:[%s10 + $0x28] sm:$0xff]
  %v755 = vld [vmem:[%s10 + $0x30] sm:$0xff]
  %v756 = vld [vmem:[%s10 + $0x38] sm:$0xff]
  %v757 = vld [vmem:[%s10 + $0x40] sm:$0xff]
  %v758 = vld [vmem:[%s10 + $0x48] sm:$0xff]
  %v759 = vld [vmem:[%s10 + $0x50] sm:$0xff]
  %v760 = vld [vmem:[%s10 + $0x58] sm:$0xff]
  %v761 = vld [vmem:[%s10 + $0x60] sm:$0xff]
  %v762 = vld [vmem:[%s10 + $0x68] sm:$0xff]
  %v763 = vld [vmem:[%s10 + $0x70] sm:$0xff]
  %v764 = vld [vmem:[%s10 + $0x78] sm:$0xff]
  %766 = vset.pattern.permute.xlu0 0
  %767 = vperm.xlu0 %766, %v749
  %v768 = vpop.permute.xlu0 %767
  %771 = vset.pattern.permute.xlu0 0
  %772 = vperm.xlu0 %771, %v750
  %v773 = vpop.permute.xlu0 %772
  %776 = vset.pattern.permute.xlu0 0
  %777 = vperm.xlu0 %776, %v751
  %v778 = vpop.permute.xlu0 %777
  %781 = vset.pattern.permute.xlu0 0
  %782 = vperm.xlu0 %781, %v752
  %v783 = vpop.permute.xlu0 %782
  %786 = vset.pattern.permute.xlu0 0
  %787 = vperm.xlu0 %786, %v753
  %v788 = vpop.permute.xlu0 %787
  %791 = vset.pattern.permute.xlu0 0
  %792 = vperm.xlu0 %791, %v754
  %v793 = vpop.permute.xlu0 %792
  %796 = vset.pattern.permute.xlu0 0
  %797 = vperm.xlu0 %796, %v755
  %v798 = vpop.permute.xlu0 %797
  %801 = vset.pattern.permute.xlu0 0
  %802 = vperm.xlu0 %801, %v756
  %v803 = vpop.permute.xlu0 %802
  %806 = vset.pattern.permute.xlu0 0
  %807 = vperm.xlu0 %806, %v757
  %v808 = vpop.permute.xlu0 %807
  %811 = vset.pattern.permute.xlu0 0
  %812 = vperm.xlu0 %811, %v758
  %v813 = vpop.permute.xlu0 %812
  %816 = vset.pattern.permute.xlu0 0
  %817 = vperm.xlu0 %816, %v759
  %v818 = vpop.permute.xlu0 %817
  %821 = vset.pattern.permute.xlu0 0
  %822 = vperm.xlu0 %821, %v760
  %v823 = vpop.permute.xlu0 %822
  %826 = vset.pattern.permute.xlu0 0
  %827 = vperm.xlu0 %826, %v761
  %v828 = vpop.permute.xlu0 %827
  %831 = vset.pattern.permute.xlu0 0
  %832 = vperm.xlu0 %831, %v762
  %v833 = vpop.permute.xlu0 %832
  %836 = vset.pattern.permute.xlu0 0
  %837 = vperm.xlu0 %836, %v763
  %v838 = vpop.permute.xlu0 %837
  %841 = vset.pattern.permute.xlu0 0
  %842 = vperm.xlu0 %841, %v764
  %v843 = vpop.permute.xlu0 %842
  %v861 = vunpack.c.l.b16 %v729
  %v862 = vunpack.c.l.b16 %v730
  %v863 = vunpack.c.l.b16 %v731
  %v864 = vunpack.c.l.b16 %v732
  %v865 = vunpack.c.l.b16 %v733
  %v866 = vunpack.c.l.b16 %v734
  %v867 = vunpack.c.l.b16 %v735
  %v868 = vunpack.c.l.b16 %v736
  %v869 = vunpack.c.l.b16 %v737
  %v870 = vunpack.c.l.b16 %v738
  %v871 = vunpack.c.l.b16 %v739
  %v872 = vunpack.c.l.b16 %v740
  %v873 = vunpack.c.l.b16 %v741
  %v874 = vunpack.c.l.b16 %v742
  %v875 = vunpack.c.l.b16 %v743
  %v876 = vunpack.c.l.b16 %v744
  %v877 = vpack.c.b16 %v862, %v861
  %v878 = vpack.c.b16 %v864, %v863
  %v879 = vpack.c.b16 %v866, %v865
  %v880 = vpack.c.b16 %v868, %v867
  %v881 = vpack.c.b16 %v870, %v869
  %v882 = vpack.c.b16 %v872, %v871
  %v883 = vpack.c.b16 %v874, %v873
  %v884 = vpack.c.b16 %v876, %v875
  %v886 = vsel %vm643, %v877, 0
  %v889 = vsel %vm643, %v878, 0
  %v892 = vsel %vm643, %v879, 0
  %v895 = vsel %vm643, %v880, 0
  %v898 = vsel %vm643, %v881, 0
  %v901 = vsel %vm643, %v882, 0
  %v904 = vsel %vm643, %v883, 0
  %v907 = vsel %vm643, %v884, 0
  %909 = vmatprep.subr.bf16.mxu0 0
  %910 = vmatpush1.bf16.msra.mxu0 %v745
  %911 = vmatprep.subr.bf16.mxu0 0
  %912 = vmatpush1.bf16.msra.mxu0 %v746
  %913 = vmatprep.subr.bf16.mxu0 0
  %914 = vmatpush1.bf16.msra.mxu0 %v747
  %915 = vmatprep.subr.bf16.mxu0 0
  %916 = vmatpush1.bf16.msra.mxu0 %v748
  %917 = vmatprep.subr.bf16.mxu0 0
  %918 = vmatpush1.bf16.msra.mxu0 0
  %919 = vmatprep.subr.bf16.mxu0 0
  %920 = vmatpush1.bf16.msra.mxu0 0
  %921 = vmatprep.subr.bf16.mxu0 0
  %922 = vmatpush1.bf16.msra.mxu0 0
  %923 = vmatprep.subr.bf16.mxu0 0
  %924 = vmatpush1.bf16.msra.mxu0 0
  %925 = vmatprep.subr.bf16.mxu0 0
  %926 = vmatpush1.bf16.msra.mxu0 0
  %927 = vmatprep.subr.bf16.mxu0 0
  %928 = vmatpush1.bf16.msra.mxu0 0
  %929 = vmatprep.subr.bf16.mxu0 0
  %930 = vmatpush1.bf16.msra.mxu0 0
  %931 = vmatprep.subr.bf16.mxu0 0
  %932 = vmatpush1.bf16.msra.mxu0 0
  %933 = vmatprep.subr.bf16.mxu0 0
  %934 = vmatpush1.bf16.msra.mxu0 0
  %935 = vmatprep.subr.bf16.mxu0 0
  %936 = vmatpush1.bf16.msra.mxu0 0
  %937 = vmatprep.subr.bf16.mxu0 0
  %938 = vmatpush1.bf16.msra.mxu0 0
  %939 = vmatprep.subr.bf16.mxu0 0
  %940 = vmatpush1.bf16.msra.mxu0 0
  %941 = vmatprep.mubr.bf16.mxu0 0
  %942 = vmatmul.mubr.bf16.gmra.mrb[0].mxu0 %v886
  %v943 = vpop.f32.mrb[0].mxu0
  %v944 = vadd.f32 %v768, %v943
  %v945 = vpop.f32.mrb[0].mxu0
  %v946 = vpop.f32.mrb[0].mxu0
  %v947 = vadd.f32 %v773, %v946
  %v948 = vpop.f32.mrb[0].mxu0
  %949 = vmatprep.mubr.bf16.mxu0 0
  %950 = vmatmul.mubr.bf16.gmra.mrb[0].mxu0 %v889
  %v951 = vpop.f32.mrb[0].mxu0
  %v952 = vadd.f32 %v778, %v951
  %v953 = vpop.f32.mrb[0].mxu0
  %v954 = vpop.f32.mrb[0].mxu0
  %v955 = vadd.f32 %v783, %v954
  %v956 = vpop.f32.mrb[0].mxu0
  %957 = vmatprep.mubr.bf16.mxu0 0
  %958 = vmatmul.mubr.bf16.gmra.mrb[0].mxu0 %v892
  %v959 = vpop.f32.mrb[0].mxu0
  %v960 = vadd.f32 %v788, %v959
  %v961 = vpop.f32.mrb[0].mxu0
  %v962 = vpop.f32.mrb[0].mxu0
  %v963 = vadd.f32 %v793, %v962
  %v964 = vpop.f32.mrb[0].mxu0
  %965 = vmatprep.mubr.bf16.mxu0 0
  %966 = vmatmul.mubr.bf16.gmra.mrb[0].mxu0 %v895
  %v967 = vpop.f32.mrb[0].mxu0
  %v968 = vadd.f32 %v798, %v967
  %v969 = vpop.f32.mrb[0].mxu0
  %v970 = vpop.f32.mrb[0].mxu0
  %v971 = vadd.f32 %v803, %v970
  %v972 = vpop.f32.mrb[0].mxu0
  %973 = vmatprep.mubr.bf16.mxu0 0
  %974 = vmatmul.mubr.bf16.gmra.mrb[0].mxu0 %v898
  %v975 = vpop.f32.mrb[0].mxu0
  %v976 = vadd.f32 %v808, %v975
  %v977 = vpop.f32.mrb[0].mxu0
  %v978 = vpop.f32.mrb[0].mxu0
  %v979 = vadd.f32 %v813, %v978
  %v980 = vpop.f32.mrb[0].mxu0
  %981 = vmatprep.mubr.bf16.mxu0 0
  %982 = vmatmul.mubr.bf16.gmra.mrb[0].mxu0 %v901
  %v983 = vpop.f32.mrb[0].mxu0
  %v984 = vadd.f32 %v818, %v983
  %v985 = vpop.f32.mrb[0].mxu0
  %v986 = vpop.f32.mrb[0].mxu0
  %v987 = vadd.f32 %v823, %v986
  %v988 = vpop.f32.mrb[0].mxu0
  %989 = vmatprep.mubr.bf16.mxu0 0
  %990 = vmatmul.mubr.bf16.gmra.mrb[0].mxu0 %v904
  %v991 = vpop.f32.mrb[0].mxu0
  %v992 = vadd.f32 %v828, %v991
  %v993 = vpop.f32.mrb[0].mxu0
  %v994 = vpop.f32.mrb[0].mxu0
  %v995 = vadd.f32 %v833, %v994
  %v996 = vpop.f32.mrb[0].mxu0
  %997 = vmatprep.mubr.bf16.mxu0 0
  %998 = vmatmul.mubr.bf16.gmra.mrb[0].mxu0 %v907
  %v999 = vpop.f32.mrb[0].mxu0
  %v1000 = vadd.f32 %v838, %v999
  %v1001 = vpop.f32.mrb[0].mxu0
  %v1002 = vpop.f32.mrb[0].mxu0
  %v1003 = vadd.f32 %v843, %v1002
  %v1004 = vpop.f32.mrb[0].mxu0
  %1005 = vdwg.mxu0
  %v1006 = vxor.u32 %v944, 2147483648
  %v1007 = vxor.u32 %v947, 2147483648
  %v1008 = vxor.u32 %v952, 2147483648
  %v1009 = vxor.u32 %v955, 2147483648
  %v1010 = vxor.u32 %v960, 2147483648
  %v1011 = vxor.u32 %v963, 2147483648
  %v1012 = vxor.u32 %v968, 2147483648
  %v1013 = vxor.u32 %v971, 2147483648
  %v1014 = vmul.f32 %v1006, 1.442695
  %v1015 = vpow.pop %v1014
  %v1016 = vmul.f32 %v1007, 1.442695
  %v1017 = vpow.pop %v1016
  %v1018 = vmul.f32 %v1008, 1.442695
  %v1019 = vpow.pop %v1018
  %v1020 = vmul.f32 %v1009, 1.442695
  %v1021 = vpow.pop %v1020
  %v1022 = vmul.f32 %v1010, 1.442695
  %v1023 = vpow.pop %v1022
  %v1024 = vmul.f32 %v1011, 1.442695
  %v1025 = vpow.pop %v1024
  %v1026 = vmul.f32 %v1012, 1.442695
  %v1027 = vpow.pop %v1026
  %v1028 = vmul.f32 %v1013, 1.442695
  %v1029 = vpow.pop %v1028
  %v1030 = vadd.f32 %v1015, 1.0
  %v1031 = vadd.f32 %v1017, 1.0
  %v1032 = vadd.f32 %v1019, 1.0
  %v1033 = vadd.f32 %v1021, 1.0
  %v1034 = vadd.f32 %v1023, 1.0
  %v1035 = vadd.f32 %v1025, 1.0
  %v1036 = vadd.f32 %v1027, 1.0
  %v1037 = vadd.f32 %v1029, 1.0
  %v1038 = vrcp.pop %v1030
  %v1039 = vmul.f32 1.0, %v1038
  %v1040 = vrcp.pop %v1031
  %v1041 = vmul.f32 1.0, %v1040
  %v1042 = vrcp.pop %v1032
  %v1043 = vmul.f32 1.0, %v1042
  %v1044 = vrcp.pop %v1033
  %v1045 = vmul.f32 1.0, %v1044
  %v1046 = vrcp.pop %v1034
  %v1047 = vmul.f32 1.0, %v1046
  %v1048 = vrcp.pop %v1035
  %v1049 = vmul.f32 1.0, %v1048
  %v1050 = vrcp.pop %v1036
  %v1051 = vmul.f32 1.0, %v1050
  %v1052 = vrcp.pop %v1037
  %v1053 = vmul.f32 1.0, %v1052
  %v1054 = vtanh.pop %v976
  %v1055 = vtanh.pop %v979
  %v1056 = vtanh.pop %v984
  %v1057 = vtanh.pop %v987
  %v1058 = vtanh.pop %v992
  %v1059 = vtanh.pop %v995
  %v1060 = vtanh.pop %v1000
  %v1061 = vtanh.pop %v1003
  %v1062 = vmul.f32 %v1039, %v1054
  %v1063 = vmul.f32 %v1041, %v1055
  %v1064 = vmul.f32 %v1043, %v1056
  %v1065 = vmul.f32 %v1045, %v1057
  %v1066 = vmul.f32 %v1047, %v1058
  %v1067 = vmul.f32 %v1049, %v1059
  %v1068 = vmul.f32 %v1051, %v1060
  %v1069 = vmul.f32 %v1053, %v1061
  %v1070 = vld [vmem:[%s11] sm:$0xf]
  %v1071 = vld [vmem:[%s11 + $0x4] sm:$0xf]
  %v1072 = vld [vmem:[%s11 + $0x8] sm:$0xf]
  %v1073 = vld [vmem:[%s11 + $0xc] sm:$0xf]
  %v1074 = vld [vmem:[%s11 + $0x10] sm:$0xf]
  %v1075 = vld [vmem:[%s11 + $0x14] sm:$0xf]
  %v1076 = vld [vmem:[%s11 + $0x18] sm:$0xf]
  %v1077 = vld [vmem:[%s11 + $0x1c] sm:$0xf]
  %v1078 = vld [vmem:[%s11 + $0x20] sm:$0xf]
  %v1079 = vld [vmem:[%s11 + $0x24] sm:$0xf]
  %v1080 = vld [vmem:[%s11 + $0x28] sm:$0xf]
  %v1081 = vld [vmem:[%s11 + $0x2c] sm:$0xf]
  %v1082 = vld [vmem:[%s11 + $0x30] sm:$0xf]
  %v1083 = vld [vmem:[%s11 + $0x34] sm:$0xf]
  %v1084 = vld [vmem:[%s11 + $0x38] sm:$0xf]
  %v1085 = vld [vmem:[%s11 + $0x3c] sm:$0xf]
  %v1086 = vpack.c.bf16 %v1063, %v1062
  %v1087 = vpack.c.bf16 %v1065, %v1064
  %v1088 = vpack.c.bf16 %v1067, %v1066
  %v1089 = vpack.c.bf16 %v1069, %v1068
  %v1090 = vld [vmem:[%s12] sm:$0xff]
  %v1091 = vld [vmem:[%s12 + $0x8] sm:$0xff]
  %v1092 = vld [vmem:[%s12 + $0x10] sm:$0xff]
  %v1093 = vld [vmem:[%s12 + $0x18] sm:$0xff]
  %v1094 = vld [vmem:[%s12 + $0x20] sm:$0xff]
  %v1095 = vld [vmem:[%s12 + $0x28] sm:$0xff]
  %v1096 = vld [vmem:[%s12 + $0x30] sm:$0xff]
  %v1097 = vld [vmem:[%s12 + $0x38] sm:$0xff]
  %v1098 = vld [vmem:[%s12 + $0x40] sm:$0xff]
  %v1099 = vld [vmem:[%s12 + $0x48] sm:$0xff]
  %v1100 = vld [vmem:[%s12 + $0x50] sm:$0xff]
  %v1101 = vld [vmem:[%s12 + $0x58] sm:$0xff]
  %v1102 = vld [vmem:[%s12 + $0x60] sm:$0xff]
  %v1103 = vld [vmem:[%s12 + $0x68] sm:$0xff]
  %v1104 = vld [vmem:[%s12 + $0x70] sm:$0xff]
  %v1105 = vld [vmem:[%s12 + $0x78] sm:$0xff]
  %1107 = vset.pattern.permute.xlu0 0
  %1108 = vperm.xlu0 %1107, %v1090
  %v1109 = vpop.permute.xlu0 %1108
  %1112 = vset.pattern.permute.xlu0 0
  %1113 = vperm.xlu0 %1112, %v1091
  %v1114 = vpop.permute.xlu0 %1113
  %1117 = vset.pattern.permute.xlu0 0
  %1118 = vperm.xlu0 %1117, %v1092
  %v1119 = vpop.permute.xlu0 %1118
  %1122 = vset.pattern.permute.xlu0 0
  %1123 = vperm.xlu0 %1122, %v1093
  %v1124 = vpop.permute.xlu0 %1123
  %1127 = vset.pattern.permute.xlu0 0
  %1128 = vperm.xlu0 %1127, %v1094
  %v1129 = vpop.permute.xlu0 %1128
  %1132 = vset.pattern.permute.xlu0 0
  %1133 = vperm.xlu0 %1132, %v1095
  %v1134 = vpop.permute.xlu0 %1133
  %1137 = vset.pattern.permute.xlu0 0
  %1138 = vperm.xlu0 %1137, %v1096
  %v1139 = vpop.permute.xlu0 %1138
  %1142 = vset.pattern.permute.xlu0 0
  %1143 = vperm.xlu0 %1142, %v1097
  %v1144 = vpop.permute.xlu0 %1143
  %1147 = vset.pattern.permute.xlu0 0
  %1148 = vperm.xlu0 %1147, %v1098
  %v1149 = vpop.permute.xlu0 %1148
  %1152 = vset.pattern.permute.xlu0 0
  %1153 = vperm.xlu0 %1152, %v1099
  %v1154 = vpop.permute.xlu0 %1153
  %1157 = vset.pattern.permute.xlu0 0
  %1158 = vperm.xlu0 %1157, %v1100
  %v1159 = vpop.permute.xlu0 %1158
  %1162 = vset.pattern.permute.xlu0 0
  %1163 = vperm.xlu0 %1162, %v1101
  %v1164 = vpop.permute.xlu0 %1163
  %1167 = vset.pattern.permute.xlu0 0
  %1168 = vperm.xlu0 %1167, %v1102
  %v1169 = vpop.permute.xlu0 %1168
  %1172 = vset.pattern.permute.xlu0 0
  %1173 = vperm.xlu0 %1172, %v1103
  %v1174 = vpop.permute.xlu0 %1173
  %1177 = vset.pattern.permute.xlu0 0
  %1178 = vperm.xlu0 %1177, %v1104
  %v1179 = vpop.permute.xlu0 %1178
  %1182 = vset.pattern.permute.xlu0 0
  %1183 = vperm.xlu0 %1182, %v1105
  %v1184 = vpop.permute.xlu0 %1183
  %v1202 = vunpack.c.l.b16 %v1070
  %v1203 = vunpack.c.l.b16 %v1071
  %v1204 = vunpack.c.l.b16 %v1072
  %v1205 = vunpack.c.l.b16 %v1073
  %v1206 = vunpack.c.l.b16 %v1074
  %v1207 = vunpack.c.l.b16 %v1075
  %v1208 = vunpack.c.l.b16 %v1076
  %v1209 = vunpack.c.l.b16 %v1077
  %v1210 = vunpack.c.l.b16 %v1078
  %v1211 = vunpack.c.l.b16 %v1079
  %v1212 = vunpack.c.l.b16 %v1080
  %v1213 = vunpack.c.l.b16 %v1081
  %v1214 = vunpack.c.l.b16 %v1082
  %v1215 = vunpack.c.l.b16 %v1083
  %v1216 = vunpack.c.l.b16 %v1084
  %v1217 = vunpack.c.l.b16 %v1085
  %v1218 = vpack.c.b16 %v1203, %v1202
  %v1219 = vpack.c.b16 %v1205, %v1204
  %v1220 = vpack.c.b16 %v1207, %v1206
  %v1221 = vpack.c.b16 %v1209, %v1208
  %v1222 = vpack.c.b16 %v1211, %v1210
  %v1223 = vpack.c.b16 %v1213, %v1212
  %v1224 = vpack.c.b16 %v1215, %v1214
  %v1225 = vpack.c.b16 %v1217, %v1216
  %v1227 = vsel %vm643, %v1218, 0
  %v1230 = vsel %vm643, %v1219, 0
  %v1233 = vsel %vm643, %v1220, 0
  %v1236 = vsel %vm643, %v1221, 0
  %v1239 = vsel %vm643, %v1222, 0
  %v1242 = vsel %vm643, %v1223, 0
  %v1245 = vsel %vm643, %v1224, 0
  %v1248 = vsel %vm643, %v1225, 0
  %1250 = vmatprep.subr.bf16.mxu0 0
  %1251 = vmatpush1.bf16.msra.mxu0 %v1086
  %1252 = vmatprep.subr.bf16.mxu0 0
  %1253 = vmatpush1.bf16.msra.mxu0 %v1087
  %1254 = vmatprep.subr.bf16.mxu0 0
  %1255 = vmatpush1.bf16.msra.mxu0 %v1088
  %1256 = vmatprep.subr.bf16.mxu0 0
  %1257 = vmatpush1.bf16.msra.mxu0 %v1089
  %1258 = vmatprep.subr.bf16.mxu0 0
  %1259 = vmatpush1.bf16.msra.mxu0 0
  %1260 = vmatprep.subr.bf16.mxu0 0
  %1261 = vmatpush1.bf16.msra.mxu0 0
  %1262 = vmatprep.subr.bf16.mxu0 0
  %1263 = vmatpush1.bf16.msra.mxu0 0
  %1264 = vmatprep.subr.bf16.mxu0 0
  %1265 = vmatpush1.bf16.msra.mxu0 0
  %1266 = vmatprep.subr.bf16.mxu0 0
  %1267 = vmatpush1.bf16.msra.mxu0 0
  %1268 = vmatprep.subr.bf16.mxu0 0
  %1269 = vmatpush1.bf16.msra.mxu0 0
  %1270 = vmatprep.subr.bf16.mxu0 0
  %1271 = vmatpush1.bf16.msra.mxu0 0
  %1272 = vmatprep.subr.bf16.mxu0 0
  %1273 = vmatpush1.bf16.msra.mxu0 0
  %1274 = vmatprep.subr.bf16.mxu0 0
  %1275 = vmatpush1.bf16.msra.mxu0 0
  %1276 = vmatprep.subr.bf16.mxu0 0
  %1277 = vmatpush1.bf16.msra.mxu0 0
  %1278 = vmatprep.subr.bf16.mxu0 0
  %1279 = vmatpush1.bf16.msra.mxu0 0
  %1280 = vmatprep.subr.bf16.mxu0 0
  %1281 = vmatpush1.bf16.msra.mxu0 0
  %1282 = vmatprep.mubr.bf16.mxu0 0
  %1283 = vmatmul.mubr.bf16.gmra.mrb[0].mxu0 %v1227
  %v1284 = vpop.f32.mrb[0].mxu0
  %v1285 = vadd.f32 %v1109, %v1284
  %v1286 = vpop.f32.mrb[0].mxu0
  %v1287 = vpop.f32.mrb[0].mxu0
  %v1288 = vadd.f32 %v1114, %v1287
  %v1289 = vpop.f32.mrb[0].mxu0
  %1290 = vmatprep.mubr.bf16.mxu0 0
  %1291 = vmatmul.mubr.bf16.gmra.mrb[0].mxu0 %v1230
  %v1292 = vpop.f32.mrb[0].mxu0
  %v1293 = vadd.f32 %v1119, %v1292
  %v1294 = vpop.f32.mrb[0].mxu0
  %v1295 = vpop.f32.mrb[0].mxu0
  %v1296 = vadd.f32 %v1124, %v1295
  %v1297 = vpop.f32.mrb[0].mxu0
  %1298 = vmatprep.mubr.bf16.mxu0 0
  %1299 = vmatmul.mubr.bf16.gmra.mrb[0].mxu0 %v1233
  %v1300 = vpop.f32.mrb[0].mxu0
  %v1301 = vadd.f32 %v1129, %v1300
  %v1302 = vpop.f32.mrb[0].mxu0
  %v1303 = vpop.f32.mrb[0].mxu0
  %v1304 = vadd.f32 %v1134, %v1303
  %v1305 = vpop.f32.mrb[0].mxu0
  %1306 = vmatprep.mubr.bf16.mxu0 0
  %1307 = vmatmul.mubr.bf16.gmra.mrb[0].mxu0 %v1236
  %v1308 = vpop.f32.mrb[0].mxu0
  %v1309 = vadd.f32 %v1139, %v1308
  %v1310 = vpop.f32.mrb[0].mxu0
  %v1311 = vpop.f32.mrb[0].mxu0
  %v1312 = vadd.f32 %v1144, %v1311
  %v1313 = vpop.f32.mrb[0].mxu0
  %1314 = vmatprep.mubr.bf16.mxu0 0
  %1315 = vmatmul.mubr.bf16.gmra.mrb[0].mxu0 %v1239
  %v1316 = vpop.f32.mrb[0].mxu0
  %v1317 = vadd.f32 %v1149, %v1316
  %v1318 = vpop.f32.mrb[0].mxu0
  %v1319 = vpop.f32.mrb[0].mxu0
  %v1320 = vadd.f32 %v1154, %v1319
  %v1321 = vpop.f32.mrb[0].mxu0
  %1322 = vmatprep.mubr.bf16.mxu0 0
  %1323 = vmatmul.mubr.bf16.gmra.mrb[0].mxu0 %v1242
  %v1324 = vpop.f32.mrb[0].mxu0
  %v1325 = vadd.f32 %v1159, %v1324
  %v1326 = vpop.f32.mrb[0].mxu0
  %v1327 = vpop.f32.mrb[0].mxu0
  %v1328 = vadd.f32 %v1164, %v1327
  %v1329 = vpop.f32.mrb[0].mxu0
  %1330 = vmatprep.mubr.bf16.mxu0 0
  %1331 = vmatmul.mubr.bf16.gmra.mrb[0].mxu0 %v1245
  %v1332 = vpop.f32.mrb[0].mxu0
  %v1333 = vadd.f32 %v1169, %v1332
  %v1334 = vpop.f32.mrb[0].mxu0
  %v1335 = vpop.f32.mrb[0].mxu0
  %v1336 = vadd.f32 %v1174, %v1335
  %v1337 = vpop.f32.mrb[0].mxu0
  %1338 = vmatprep.mubr.bf16.mxu0 0
  %1339 = vmatmul.mubr.bf16.gmra.mrb[0].mxu0 %v1248
  %v1340 = vpop.f32.mrb[0].mxu0
  %v1341 = vadd.f32 %v1179, %v1340
  %v1342 = vpop.f32.mrb[0].mxu0
  %v1343 = vpop.f32.mrb[0].mxu0
  %v1344 = vadd.f32 %v1184, %v1343
  %v1345 = vpop.f32.mrb[0].mxu0
  %1346 = vdwg.mxu0
  %v1347 = vadd.f32 %v218, %v1285
  %v1348 = vadd.f32 %v219, %v1288
  %v1349 = vadd.f32 %v220, %v1293
  %v1350 = vadd.f32 %v221, %v1296
  %v1351 = vadd.f32 %v222, %v1301
  %v1352 = vadd.f32 %v223, %v1304
  %v1353 = vadd.f32 %v224, %v1309
  %v1354 = vadd.f32 %v225, %v1312
  %v1355 = vmul.f32 %v1347, 0.70710677
  %v1356 = vmul.f32 %v1348, 0.70710677
  %v1357 = vmul.f32 %v1349, 0.70710677
  %v1358 = vmul.f32 %v1350, 0.70710677
  %v1359 = vmul.f32 %v1351, 0.70710677
  %v1360 = vmul.f32 %v1352, 0.70710677
  %v1361 = vmul.f32 %v1353, 0.70710677
  %v1362 = vmul.f32 %v1354, 0.70710677
  %v1363 = vadd.f32 %v1317, 0.0
  %v1364 = vadd.f32 %v1320, 0.0
  %v1365 = vadd.f32 %v1325, 0.0
  %v1366 = vadd.f32 %v1328, 0.0
  %v1367 = vadd.f32 %v1333, 0.0
  %v1368 = vadd.f32 %v1336, 0.0
  %v1369 = vadd.f32 %v1341, 0.0
  %v1370 = vadd.f32 %v1344, 0.0
  %s1371 = scalar_lea.vmem %s1, 64
  %v1372 = vld [vmem:[%s1371] sm:$0xff]
  %v1373 = vld [vmem:[%s1371 + $0x8] sm:$0xff]
  %v1374 = vld [vmem:[%s1371 + $0x10] sm:$0xff]
  %v1375 = vld [vmem:[%s1371 + $0x18] sm:$0xff]
  %v1376 = vld [vmem:[%s1371 + $0x20] sm:$0xff]
  %v1377 = vld [vmem:[%s1371 + $0x28] sm:$0xff]
  %v1378 = vld [vmem:[%s1371 + $0x30] sm:$0xff]
  %v1379 = vld [vmem:[%s1371 + $0x38] sm:$0xff]
  %1381 = vset.pattern.permute.xlu0 0
  %1382 = vperm.xlu0 %1381, %v1372
  %v1383 = vpop.permute.xlu0 %1382
  %1386 = vset.pattern.permute.xlu0 0
  %1387 = vperm.xlu0 %1386, %v1373
  %v1388 = vpop.permute.xlu0 %1387
  %1391 = vset.pattern.permute.xlu0 0
  %1392 = vperm.xlu0 %1391, %v1374
  %v1393 = vpop.permute.xlu0 %1392
  %1396 = vset.pattern.permute.xlu0 0
  %1397 = vperm.xlu0 %1396, %v1375
  %v1398 = vpop.permute.xlu0 %1397
  %1401 = vset.pattern.permute.xlu0 0
  %1402 = vperm.xlu0 %1401, %v1376
  %v1403 = vpop.permute.xlu0 %1402
  %1406 = vset.pattern.permute.xlu0 0
  %1407 = vperm.xlu0 %1406, %v1377
  %v1408 = vpop.permute.xlu0 %1407
  %1411 = vset.pattern.permute.xlu0 0
  %1412 = vperm.xlu0 %1411, %v1378
  %v1413 = vpop.permute.xlu0 %1412
  %1416 = vset.pattern.permute.xlu0 0
  %1417 = vperm.xlu0 %1416, %v1379
  %v1418 = vpop.permute.xlu0 %1417
  %v1420 = vadd.f32 %v1355, %v1383
  %v1421 = vadd.f32 %v1356, %v1388
  %v1422 = vadd.f32 %v1357, %v1393
  %v1423 = vadd.f32 %v1358, %v1398
  %v1424 = vadd.f32 %v1359, %v1403
  %v1425 = vadd.f32 %v1360, %v1408
  %v1426 = vadd.f32 %v1361, %v1413
  %v1427 = vadd.f32 %v1362, %v1418
  %s1428 = scalar_lea.vmem %s5, 64
  %v1429 = vld [vmem:[%s1428] sm:$0xf]
  %v1430 = vld [vmem:[%s1428 + $0x4] sm:$0xf]
  %v1431 = vld [vmem:[%s1428 + $0x8] sm:$0xf]
  %v1432 = vld [vmem:[%s1428 + $0xc] sm:$0xf]
  %v1433 = vld [vmem:[%s1428 + $0x10] sm:$0xf]
  %v1434 = vld [vmem:[%s1428 + $0x14] sm:$0xf]
  %v1435 = vld [vmem:[%s1428 + $0x18] sm:$0xf]
  %v1436 = vld [vmem:[%s1428 + $0x1c] sm:$0xf]
  %v1437 = vld [vmem:[%s1428 + $0x20] sm:$0xf]
  %v1438 = vld [vmem:[%s1428 + $0x24] sm:$0xf]
  %v1439 = vld [vmem:[%s1428 + $0x28] sm:$0xf]
  %v1440 = vld [vmem:[%s1428 + $0x2c] sm:$0xf]
  %v1441 = vld [vmem:[%s1428 + $0x30] sm:$0xf]
  %v1442 = vld [vmem:[%s1428 + $0x34] sm:$0xf]
  %v1443 = vld [vmem:[%s1428 + $0x38] sm:$0xf]
  %v1444 = vld [vmem:[%s1428 + $0x3c] sm:$0xf]
  %v1445 = vpack.c.bf16 %v1421, %v1420
  %v1446 = vpack.c.bf16 %v1423, %v1422
  %v1447 = vpack.c.bf16 %v1425, %v1424
  %v1448 = vpack.c.bf16 %v1427, %v1426
  %s1449 = scalar_lea.vmem %s6, 1
  %v1450 = vld [vmem:[%s1449] sm:$0x1]
  %v1452 = vlaneseq
  %v1453 = vshrl.u32 %v1452, 7
  %v1454 = vsub.s32 0, %v1453
  %v1455 = vrot.slane %v1450, %v1454
  %v1473 = vunpack.c.l.b16 %v1429
  %v1474 = vunpack.c.l.b16 %v1430
  %v1475 = vunpack.c.l.b16 %v1431
  %v1476 = vunpack.c.l.b16 %v1432
  %v1477 = vunpack.c.l.b16 %v1433
  %v1478 = vunpack.c.l.b16 %v1434
  %v1479 = vunpack.c.l.b16 %v1435
  %v1480 = vunpack.c.l.b16 %v1436
  %v1481 = vunpack.c.l.b16 %v1437
  %v1482 = vunpack.c.l.b16 %v1438
  %v1483 = vunpack.c.l.b16 %v1439
  %v1484 = vunpack.c.l.b16 %v1440
  %v1485 = vunpack.c.l.b16 %v1441
  %v1486 = vunpack.c.l.b16 %v1442
  %v1487 = vunpack.c.l.b16 %v1443
  %v1488 = vunpack.c.l.b16 %v1444
  %v1489 = vpack.c.b16 %v1474, %v1473
  %v1490 = vpack.c.b16 %v1476, %v1475
  %v1491 = vpack.c.b16 %v1478, %v1477
  %v1492 = vpack.c.b16 %v1480, %v1479
  %v1493 = vpack.c.b16 %v1482, %v1481
  %v1494 = vpack.c.b16 %v1484, %v1483
  %v1495 = vpack.c.b16 %v1486, %v1485
  %v1496 = vpack.c.b16 %v1488, %v1487
  %1505 = vmatprep.subr.bf16.mxu0 0
  %1506 = vmatpush1.bf16.msra.mxu0 %v1489
  %1507 = vmatprep.subr.bf16.mxu0 0
  %1508 = vmatpush1.bf16.msra.mxu0 %v1490
  %1509 = vmatprep.subr.bf16.mxu0 0
  %1510 = vmatpush1.bf16.msra.mxu0 %v1491
  %1511 = vmatprep.subr.bf16.mxu0 0
  %1512 = vmatpush1.bf16.msra.mxu0 %v1492
  %1513 = vmatprep.subr.bf16.mxu0 0
  %1514 = vmatpush1.bf16.msra.mxu0 %v1493
  %1515 = vmatprep.subr.bf16.mxu0 0
  %1516 = vmatpush1.bf16.msra.mxu0 %v1494
  %1517 = vmatprep.subr.bf16.mxu0 0
  %1518 = vmatpush1.bf16.msra.mxu0 %v1495
  %1519 = vmatprep.subr.bf16.mxu0 0
  %1520 = vmatpush1.bf16.msra.mxu0 %v1496
  %1521 = vmatprep.subr.bf16.mxu0 0
  %1522 = vmatpush1.bf16.msra.mxu0 0
  %1523 = vmatprep.subr.bf16.mxu0 0
  %1524 = vmatpush1.bf16.msra.mxu0 0
  %1525 = vmatprep.subr.bf16.mxu0 0
  %1526 = vmatpush1.bf16.msra.mxu0 0
  %1527 = vmatprep.subr.bf16.mxu0 0
  %1528 = vmatpush1.bf16.msra.mxu0 0
  %1529 = vmatprep.subr.bf16.mxu0 0
  %1530 = vmatpush1.bf16.msra.mxu0 0
  %1531 = vmatprep.subr.bf16.mxu0 0
  %1532 = vmatpush1.bf16.msra.mxu0 0
  %1533 = vmatprep.subr.bf16.mxu0 0
  %1534 = vmatpush1.bf16.msra.mxu0 0
  %1535 = vmatprep.subr.bf16.mxu0 0
  %1536 = vmatpush1.bf16.msra.mxu0 0
  %1537 = vmatprep.mubr.bf16.mxu0 0
  %1538 = vmatmul.mubr.bf16.gmra.mrb[0].mxu0 %v1445
  %v1539 = vpop.f32.mrb[0].mxu0
  %v1540 = vadd.f32 %v1455, %v1539
  %v1541 = vpop.f32.mrb[0].mxu0
  %v1542 = vpop.f32.mrb[0].mxu0
  %v1543 = vadd.f32 %v1455, %v1542
  %v1544 = vpop.f32.mrb[0].mxu0
  %1545 = vmatprep.mubr.bf16.mxu0 0
  %1546 = vmatmul.mubr.bf16.gmra.mrb[0].mxu0 %v1446
  %v1547 = vpop.f32.mrb[0].mxu0
  %v1548 = vadd.f32 %v1455, %v1547
  %v1549 = vpop.f32.mrb[0].mxu0
  %v1550 = vpop.f32.mrb[0].mxu0
  %v1551 = vadd.f32 %v1455, %v1550
  %v1552 = vpop.f32.mrb[0].mxu0
  %1553 = vmatprep.mubr.bf16.mxu0 0
  %1554 = vmatmul.mubr.bf16.gmra.mrb[0].mxu0 %v1447
  %v1555 = vpop.f32.mrb[0].mxu0
  %v1556 = vadd.f32 %v1455, %v1555
  %v1557 = vpop.f32.mrb[0].mxu0
  %v1558 = vpop.f32.mrb[0].mxu0
  %v1559 = vadd.f32 %v1455, %v1558
  %v1560 = vpop.f32.mrb[0].mxu0
  %1561 = vmatprep.mubr.bf16.mxu0 0
  %1562 = vmatmul.mubr.bf16.gmra.mrb[0].mxu0 %v1448
  %v1563 = vpop.f32.mrb[0].mxu0
  %v1564 = vadd.f32 %v1455, %v1563
  %v1565 = vpop.f32.mrb[0].mxu0
  %v1566 = vpop.f32.mrb[0].mxu0
  %v1567 = vadd.f32 %v1455, %v1566
  %v1568 = vpop.f32.mrb[0].mxu0
  %1569 = vdwg.mxu0
  %v1570 = vmax.f32 %v1540, 0.0
  %v1571 = vmax.f32 %v1543, 0.0
  %v1572 = vmax.f32 %v1548, 0.0
  %v1573 = vmax.f32 %v1551, 0.0
  %v1574 = vmax.f32 %v1556, 0.0
  %v1575 = vmax.f32 %v1559, 0.0
  %v1576 = vmax.f32 %v1564, 0.0
  %v1577 = vmax.f32 %v1567, 0.0
  %v1578 = vpack.c.bf16 %v1571, %v1570
  %v1579 = vpack.c.bf16 %v1573, %v1572
  %v1580 = vpack.c.bf16 %v1575, %v1574
  %v1581 = vpack.c.bf16 %v1577, %v1576
  %1582 = vmatprep.subr.bf16.mxu0 0
  %1583 = vmatpush1.bf16.msra.mxu0 %v482
  %1584 = vmatprep.subr.bf16.mxu0 0
  %1585 = vmatpush1.bf16.msra.mxu0 %v483
  %1586 = vmatprep.subr.bf16.mxu0 0
  %1587 = vmatpush1.bf16.msra.mxu0 %v484
  %1588 = vmatprep.subr.bf16.mxu0 0
  %1589 = vmatpush1.bf16.msra.mxu0 %v485
  %1590 = vmatprep.subr.bf16.mxu0 0
  %1591 = vmatpush1.bf16.msra.mxu0 %v486
  %1592 = vmatprep.subr.bf16.mxu0 0
  %1593 = vmatpush1.bf16.msra.mxu0 %v487
  %1594 = vmatprep.subr.bf16.mxu0 0
  %1595 = vmatpush1.bf16.msra.mxu0 %v488
  %1596 = vmatprep.subr.bf16.mxu0 0
  %1597 = vmatpush1.bf16.msra.mxu0 %v489
  %1598 = vmatprep.subr.bf16.mxu0 0
  %1599 = vmatpush1.bf16.msra.mxu0 0
  %1600 = vmatprep.subr.bf16.mxu0 0
  %1601 = vmatpush1.bf16.msra.mxu0 0
  %1602 = vmatprep.subr.bf16.mxu0 0
  %1603 = vmatpush1.bf16.msra.mxu0 0
  %1604 = vmatprep.subr.bf16.mxu0 0
  %1605 = vmatpush1.bf16.msra.mxu0 0
  %1606 = vmatprep.subr.bf16.mxu0 0
  %1607 = vmatpush1.bf16.msra.mxu0 0
  %1608 = vmatprep.subr.bf16.mxu0 0
  %1609 = vmatpush1.bf16.msra.mxu0 0
  %1610 = vmatprep.subr.bf16.mxu0 0
  %1611 = vmatpush1.bf16.msra.mxu0 0
  %1612 = vmatprep.subr.bf16.mxu0 0
  %1613 = vmatpush1.bf16.msra.mxu0 0
  %1614 = vmatprep.mubr.bf16.mxu0 0
  %1615 = vmatmul.mubr.bf16.gmra.mrb[0].mxu0 %v1578
  %v1616 = vpop.f32.mrb[0].mxu0
  %v1617 = vadd.f32 0.0, %v1616
  %v1618 = vpop.f32.mrb[0].mxu0
  %v1619 = vpop.f32.mrb[0].mxu0
  %v1620 = vadd.f32 0.0, %v1619
  %v1621 = vpop.f32.mrb[0].mxu0
  %1622 = vmatprep.mubr.bf16.mxu0 0
  %1623 = vmatmul.mubr.bf16.gmra.mrb[0].mxu0 %v1579
  %v1624 = vpop.f32.mrb[0].mxu0
  %v1625 = vadd.f32 0.0, %v1624
  %v1626 = vpop.f32.mrb[0].mxu0
  %v1627 = vpop.f32.mrb[0].mxu0
  %v1628 = vadd.f32 0.0, %v1627
  %v1629 = vpop.f32.mrb[0].mxu0
  %1630 = vmatprep.mubr.bf16.mxu0 0
  %1631 = vmatmul.mubr.bf16.gmra.mrb[0].mxu0 %v1580
  %v1632 = vpop.f32.mrb[0].mxu0
  %v1633 = vadd.f32 0.0, %v1632
  %v1634 = vpop.f32.mrb[0].mxu0
  %v1635 = vpop.f32.mrb[0].mxu0
  %v1636 = vadd.f32 0.0, %v1635
  %v1637 = vpop.f32.mrb[0].mxu0
  %1638 = vmatprep.mubr.bf16.mxu0 0
  %1639 = vmatmul.mubr.bf16.gmra.mrb[0].mxu0 %v1581
  %v1640 = vpop.f32.mrb[0].mxu0
  %v1641 = vadd.f32 0.0, %v1640
  %v1642 = vpop.f32.mrb[0].mxu0
  %v1643 = vpop.f32.mrb[0].mxu0
  %v1644 = vadd.f32 0.0, %v1643
  %v1645 = vpop.f32.mrb[0].mxu0
  %1646 = vdwg.mxu0
  %s1647 = scalar_lea.vmem %s7, 32
  %v1648 = vld [vmem:[%s1647] sm:$0xf]
  %v1649 = vld [vmem:[%s1647 + $0x4] sm:$0xf]
  %v1650 = vld [vmem:[%s1647 + $0x8] sm:$0xf]
  %v1651 = vld [vmem:[%s1647 + $0xc] sm:$0xf]
  %v1652 = vld [vmem:[%s1647 + $0x10] sm:$0xf]
  %v1653 = vld [vmem:[%s1647 + $0x14] sm:$0xf]
  %v1654 = vld [vmem:[%s1647 + $0x18] sm:$0xf]
  %v1655 = vld [vmem:[%s1647 + $0x1c] sm:$0xf]
  %v1656 = vpack.c.bf16 %v1620, %v1617
  %v1657 = vpack.c.bf16 %v1628, %v1625
  %v1658 = vpack.c.bf16 %v1636, %v1633
  %v1659 = vpack.c.bf16 %v1644, %v1641
  %s1660 = scalar_lea.vmem %s8, 64
  %v1661 = vld [vmem:[%s1660] sm:$0xff]
  %v1662 = vld [vmem:[%s1660 + $0x8] sm:$0xff]
  %v1663 = vld [vmem:[%s1660 + $0x10] sm:$0xff]
  %v1664 = vld [vmem:[%s1660 + $0x18] sm:$0xff]
  %v1665 = vld [vmem:[%s1660 + $0x20] sm:$0xff]
  %v1666 = vld [vmem:[%s1660 + $0x28] sm:$0xff]
  %v1667 = vld [vmem:[%s1660 + $0x30] sm:$0xff]
  %v1668 = vld [vmem:[%s1660 + $0x38] sm:$0xff]
  %1670 = vset.pattern.permute.xlu0 0
  %1671 = vperm.xlu0 %1670, %v1661
  %v1672 = vpop.permute.xlu0 %1671
  %1675 = vset.pattern.permute.xlu0 0
  %1676 = vperm.xlu0 %1675, %v1662
  %v1677 = vpop.permute.xlu0 %1676
  %1680 = vset.pattern.permute.xlu0 0
  %1681 = vperm.xlu0 %1680, %v1663
  %v1682 = vpop.permute.xlu0 %1681
  %1685 = vset.pattern.permute.xlu0 0
  %1686 = vperm.xlu0 %1685, %v1664
  %v1687 = vpop.permute.xlu0 %1686
  %1690 = vset.pattern.permute.xlu0 0
  %1691 = vperm.xlu0 %1690, %v1665
  %v1692 = vpop.permute.xlu0 %1691
  %1695 = vset.pattern.permute.xlu0 0
  %1696 = vperm.xlu0 %1695, %v1666
  %v1697 = vpop.permute.xlu0 %1696
  %1700 = vset.pattern.permute.xlu0 0
  %1701 = vperm.xlu0 %1700, %v1667
  %v1702 = vpop.permute.xlu0 %1701
  %1705 = vset.pattern.permute.xlu0 0
  %1706 = vperm.xlu0 %1705, %v1668
  %v1707 = vpop.permute.xlu0 %1706
  %v1717 = vunpack.c.l.b16 %v1648
  %v1718 = vunpack.c.l.b16 %v1649
  %v1719 = vunpack.c.l.b16 %v1650
  %v1720 = vunpack.c.l.b16 %v1651
  %v1721 = vunpack.c.l.b16 %v1652
  %v1722 = vunpack.c.l.b16 %v1653
  %v1723 = vunpack.c.l.b16 %v1654
  %v1724 = vunpack.c.l.b16 %v1655
  %v1725 = vpack.c.b16 %v1718, %v1717
  %v1726 = vpack.c.b16 %v1720, %v1719
  %v1727 = vpack.c.b16 %v1722, %v1721
  %v1728 = vpack.c.b16 %v1724, %v1723
  %v1730 = vsel %vm643, %v1725, 0
  %v1733 = vsel %vm643, %v1726, 0
  %v1736 = vsel %vm643, %v1727, 0
  %v1739 = vsel %vm643, %v1728, 0
  %1741 = vmatprep.subr.bf16.mxu0 0
  %1742 = vmatpush1.bf16.msra.mxu0 %v1656
  %1743 = vmatprep.subr.bf16.mxu0 0
  %1744 = vmatpush1.bf16.msra.mxu0 %v1657
  %1745 = vmatprep.subr.bf16.mxu0 0
  %1746 = vmatpush1.bf16.msra.mxu0 %v1658
  %1747 = vmatprep.subr.bf16.mxu0 0
  %1748 = vmatpush1.bf16.msra.mxu0 %v1659
  %1749 = vmatprep.subr.bf16.mxu0 0
  %1750 = vmatpush1.bf16.msra.mxu0 0
  %1751 = vmatprep.subr.bf16.mxu0 0
  %1752 = vmatpush1.bf16.msra.mxu0 0
  %1753 = vmatprep.subr.bf16.mxu0 0
  %1754 = vmatpush1.bf16.msra.mxu0 0
  %1755 = vmatprep.subr.bf16.mxu0 0
  %1756 = vmatpush1.bf16.msra.mxu0 0
  %1757 = vmatprep.subr.bf16.mxu0 0
  %1758 = vmatpush1.bf16.msra.mxu0 0
  %1759 = vmatprep.subr.bf16.mxu0 0
  %1760 = vmatpush1.bf16.msra.mxu0 0
  %1761 = vmatprep.subr.bf16.mxu0 0
  %1762 = vmatpush1.bf16.msra.mxu0 0
  %1763 = vmatprep.subr.bf16.mxu0 0
  %1764 = vmatpush1.bf16.msra.mxu0 0
  %1765 = vmatprep.subr.bf16.mxu0 0
  %1766 = vmatpush1.bf16.msra.mxu0 0
  %1767 = vmatprep.subr.bf16.mxu0 0
  %1768 = vmatpush1.bf16.msra.mxu0 0
  %1769 = vmatprep.subr.bf16.mxu0 0
  %1770 = vmatpush1.bf16.msra.mxu0 0
  %1771 = vmatprep.subr.bf16.mxu0 0
  %1772 = vmatpush1.bf16.msra.mxu0 0
  %1773 = vmatprep.mubr.bf16.mxu0 0
  %1774 = vmatmul.mubr.bf16.gmra.mrb[0].mxu0 %v1730
  %v1775 = vpop.f32.mrb[0].mxu0
  %v1776 = vadd.f32 %v1672, %v1775
  %v1777 = vpop.f32.mrb[0].mxu0
  %v1778 = vpop.f32.mrb[0].mxu0
  %v1779 = vadd.f32 %v1677, %v1778
  %v1780 = vpop.f32.mrb[0].mxu0
  %1781 = vmatprep.mubr.bf16.mxu0 0
  %1782 = vmatmul.mubr.bf16.gmra.mrb[0].mxu0 %v1733
  %v1783 = vpop.f32.mrb[0].mxu0
  %v1784 = vadd.f32 %v1682, %v1783
  %v1785 = vpop.f32.mrb[0].mxu0
  %v1786 = vpop.f32.mrb[0].mxu0
  %v1787 = vadd.f32 %v1687, %v1786
  %v1788 = vpop.f32.mrb[0].mxu0
  %1789 = vmatprep.mubr.bf16.mxu0 0
  %1790 = vmatmul.mubr.bf16.gmra.mrb[0].mxu0 %v1736
  %v1791 = vpop.f32.mrb[0].mxu0
  %v1792 = vadd.f32 %v1692, %v1791
  %v1793 = vpop.f32.mrb[0].mxu0
  %v1794 = vpop.f32.mrb[0].mxu0
  %v1795 = vadd.f32 %v1697, %v1794
  %v1796 = vpop.f32.mrb[0].mxu0
  %1797 = vmatprep.mubr.bf16.mxu0 0
  %1798 = vmatmul.mubr.bf16.gmra.mrb[0].mxu0 %v1739
  %v1799 = vpop.f32.mrb[0].mxu0
  %v1800 = vadd.f32 %v1702, %v1799
  %v1801 = vpop.f32.mrb[0].mxu0
  %v1802 = vpop.f32.mrb[0].mxu0
  %v1803 = vadd.f32 %v1707, %v1802
  %v1804 = vpop.f32.mrb[0].mxu0
  %1805 = vdwg.mxu0
  %v1806 = vmax.f32 %v1776, 0.0
  %v1807 = vmax.f32 %v1779, 0.0
  %v1808 = vmax.f32 %v1784, 0.0
  %v1809 = vmax.f32 %v1787, 0.0
  %v1810 = vmax.f32 %v1792, 0.0
  %v1811 = vmax.f32 %v1795, 0.0
  %v1812 = vmax.f32 %v1800, 0.0
  %v1813 = vmax.f32 %v1803, 0.0
  %s1814 = scalar_lea.vmem %s9, 64
  %v1815 = vld [vmem:[%s1814] sm:$0xf]
  %v1816 = vld [vmem:[%s1814 + $0x4] sm:$0xf]
  %v1817 = vld [vmem:[%s1814 + $0x8] sm:$0xf]
  %v1818 = vld [vmem:[%s1814 + $0xc] sm:$0xf]
  %v1819 = vld [vmem:[%s1814 + $0x10] sm:$0xf]
  %v1820 = vld [vmem:[%s1814 + $0x14] sm:$0xf]
  %v1821 = vld [vmem:[%s1814 + $0x18] sm:$0xf]
  %v1822 = vld [vmem:[%s1814 + $0x1c] sm:$0xf]
  %v1823 = vld [vmem:[%s1814 + $0x20] sm:$0xf]
  %v1824 = vld [vmem:[%s1814 + $0x24] sm:$0xf]
  %v1825 = vld [vmem:[%s1814 + $0x28] sm:$0xf]
  %v1826 = vld [vmem:[%s1814 + $0x2c] sm:$0xf]
  %v1827 = vld [vmem:[%s1814 + $0x30] sm:$0xf]
  %v1828 = vld [vmem:[%s1814 + $0x34] sm:$0xf]
  %v1829 = vld [vmem:[%s1814 + $0x38] sm:$0xf]
  %v1830 = vld [vmem:[%s1814 + $0x3c] sm:$0xf]
  %v1831 = vpack.c.bf16 %v1807, %v1806
  %v1832 = vpack.c.bf16 %v1809, %v1808
  %v1833 = vpack.c.bf16 %v1811, %v1810
  %v1834 = vpack.c.bf16 %v1813, %v1812
  %s1835 = scalar_lea.vmem %s10, 128
  %v1836 = vld [vmem:[%s1835] sm:$0xff]
  %v1837 = vld [vmem:[%s1835 + $0x8] sm:$0xff]
  %v1838 = vld [vmem:[%s1835 + $0x10] sm:$0xff]
  %v1839 = vld [vmem:[%s1835 + $0x18] sm:$0xff]
  %v1840 = vld [vmem:[%s1835 + $0x20] sm:$0xff]
  %v1841 = vld [vmem:[%s1835 + $0x28] sm:$0xff]
  %v1842 = vld [vmem:[%s1835 + $0x30] sm:$0xff]
  %v1843 = vld [vmem:[%s1835 + $0x38] sm:$0xff]
  %v1844 = vld [vmem:[%s1835 + $0x40] sm:$0xff]
  %v1845 = vld [vmem:[%s1835 + $0x48] sm:$0xff]
  %v1846 = vld [vmem:[%s1835 + $0x50] sm:$0xff]
  %v1847 = vld [vmem:[%s1835 + $0x58] sm:$0xff]
  %v1848 = vld [vmem:[%s1835 + $0x60] sm:$0xff]
  %v1849 = vld [vmem:[%s1835 + $0x68] sm:$0xff]
  %v1850 = vld [vmem:[%s1835 + $0x70] sm:$0xff]
  %v1851 = vld [vmem:[%s1835 + $0x78] sm:$0xff]
  %1853 = vset.pattern.permute.xlu0 0
  %1854 = vperm.xlu0 %1853, %v1836
  %v1855 = vpop.permute.xlu0 %1854
  %1858 = vset.pattern.permute.xlu0 0
  %1859 = vperm.xlu0 %1858, %v1837
  %v1860 = vpop.permute.xlu0 %1859
  %1863 = vset.pattern.permute.xlu0 0
  %1864 = vperm.xlu0 %1863, %v1838
  %v1865 = vpop.permute.xlu0 %1864
  %1868 = vset.pattern.permute.xlu0 0
  %1869 = vperm.xlu0 %1868, %v1839
  %v1870 = vpop.permute.xlu0 %1869
  %1873 = vset.pattern.permute.xlu0 0
  %1874 = vperm.xlu0 %1873, %v1840
  %v1875 = vpop.permute.xlu0 %1874
  %1878 = vset.pattern.permute.xlu0 0
  %1879 = vperm.xlu0 %1878, %v1841
  %v1880 = vpop.permute.xlu0 %1879
  %1883 = vset.pattern.permute.xlu0 0
  %1884 = vperm.xlu0 %1883, %v1842
  %v1885 = vpop.permute.xlu0 %1884
  %1888 = vset.pattern.permute.xlu0 0
  %1889 = vperm.xlu0 %1888, %v1843
  %v1890 = vpop.permute.xlu0 %1889
  %1893 = vset.pattern.permute.xlu0 0
  %1894 = vperm.xlu0 %1893, %v1844
  %v1895 = vpop.permute.xlu0 %1894
  %1898 = vset.pattern.permute.xlu0 0
  %1899 = vperm.xlu0 %1898, %v1845
  %v1900 = vpop.permute.xlu0 %1899
  %1903 = vset.pattern.permute.xlu0 0
  %1904 = vperm.xlu0 %1903, %v1846
  %v1905 = vpop.permute.xlu0 %1904
  %1908 = vset.pattern.permute.xlu0 0
  %1909 = vperm.xlu0 %1908, %v1847
  %v1910 = vpop.permute.xlu0 %1909
  %1913 = vset.pattern.permute.xlu0 0
  %1914 = vperm.xlu0 %1913, %v1848
  %v1915 = vpop.permute.xlu0 %1914
  %1918 = vset.pattern.permute.xlu0 0
  %1919 = vperm.xlu0 %1918, %v1849
  %v1920 = vpop.permute.xlu0 %1919
  %1923 = vset.pattern.permute.xlu0 0
  %1924 = vperm.xlu0 %1923, %v1850
  %v1925 = vpop.permute.xlu0 %1924
  %1928 = vset.pattern.permute.xlu0 0
  %1929 = vperm.xlu0 %1928, %v1851
  %v1930 = vpop.permute.xlu0 %1929
  %v1948 = vunpack.c.l.b16 %v1815
  %v1949 = vunpack.c.l.b16 %v1816
  %v1950 = vunpack.c.l.b16 %v1817
  %v1951 = vunpack.c.l.b16 %v1818
  %v1952 = vunpack.c.l.b16 %v1819
  %v1953 = vunpack.c.l.b16 %v1820
  %v1954 = vunpack.c.l.b16 %v1821
  %v1955 = vunpack.c.l.b16 %v1822
  %v1956 = vunpack.c.l.b16 %v1823
  %v1957 = vunpack.c.l.b16 %v1824
  %v1958 = vunpack.c.l.b16 %v1825
  %v1959 = vunpack.c.l.b16 %v1826
  %v1960 = vunpack.c.l.b16 %v1827
  %v1961 = vunpack.c.l.b16 %v1828
  %v1962 = vunpack.c.l.b16 %v1829
  %v1963 = vunpack.c.l.b16 %v1830
  %v1964 = vpack.c.b16 %v1949, %v1948
  %v1965 = vpack.c.b16 %v1951, %v1950
  %v1966 = vpack.c.b16 %v1953, %v1952
  %v1967 = vpack.c.b16 %v1955, %v1954
  %v1968 = vpack.c.b16 %v1957, %v1956
  %v1969 = vpack.c.b16 %v1959, %v1958
  %v1970 = vpack.c.b16 %v1961, %v1960
  %v1971 = vpack.c.b16 %v1963, %v1962
  %v1973 = vsel %vm643, %v1964, 0
  %v1976 = vsel %vm643, %v1965, 0
  %v1979 = vsel %vm643, %v1966, 0
  %v1982 = vsel %vm643, %v1967, 0
  %v1985 = vsel %vm643, %v1968, 0
  %v1988 = vsel %vm643, %v1969, 0
  %v1991 = vsel %vm643, %v1970, 0
  %v1994 = vsel %vm643, %v1971, 0
  %1996 = vmatprep.subr.bf16.mxu0 0
  %1997 = vmatpush1.bf16.msra.mxu0 %v1831
  %1998 = vmatprep.subr.bf16.mxu0 0
  %1999 = vmatpush1.bf16.msra.mxu0 %v1832
  %2000 = vmatprep.subr.bf16.mxu0 0
  %2001 = vmatpush1.bf16.msra.mxu0 %v1833
  %2002 = vmatprep.subr.bf16.mxu0 0
  %2003 = vmatpush1.bf16.msra.mxu0 %v1834
  %2004 = vmatprep.subr.bf16.mxu0 0
  %2005 = vmatpush1.bf16.msra.mxu0 0
  %2006 = vmatprep.subr.bf16.mxu0 0
  %2007 = vmatpush1.bf16.msra.mxu0 0
  %2008 = vmatprep.subr.bf16.mxu0 0
  %2009 = vmatpush1.bf16.msra.mxu0 0
  %2010 = vmatprep.subr.bf16.mxu0 0
  %2011 = vmatpush1.bf16.msra.mxu0 0
  %2012 = vmatprep.subr.bf16.mxu0 0
  %2013 = vmatpush1.bf16.msra.mxu0 0
  %2014 = vmatprep.subr.bf16.mxu0 0
  %2015 = vmatpush1.bf16.msra.mxu0 0
  %2016 = vmatprep.subr.bf16.mxu0 0
  %2017 = vmatpush1.bf16.msra.mxu0 0
  %2018 = vmatprep.subr.bf16.mxu0 0
  %2019 = vmatpush1.bf16.msra.mxu0 0
  %2020 = vmatprep.subr.bf16.mxu0 0
  %2021 = vmatpush1.bf16.msra.mxu0 0
  %2022 = vmatprep.subr.bf16.mxu0 0
  %2023 = vmatpush1.bf16.msra.mxu0 0
  %2024 = vmatprep.subr.bf16.mxu0 0
  %2025 = vmatpush1.bf16.msra.mxu0 0
  %2026 = vmatprep.subr.bf16.mxu0 0
  %2027 = vmatpush1.bf16.msra.mxu0 0
  %2028 = vmatprep.mubr.bf16.mxu0 0
  %2029 = vmatmul.mubr.bf16.gmra.mrb[0].mxu0 %v1973
  %v2030 = vpop.f32.mrb[0].mxu0
  %v2031 = vadd.f32 %v1855, %v2030
  %v2032 = vpop.f32.mrb[0].mxu0
  %v2033 = vpop.f32.mrb[0].mxu0
  %v2034 = vadd.f32 %v1860, %v2033
  %v2035 = vpop.f32.mrb[0].mxu0
  %2036 = vmatprep.mubr.bf16.mxu0 0
  %2037 = vmatmul.mubr.bf16.gmra.mrb[0].mxu0 %v1976
  %v2038 = vpop.f32.mrb[0].mxu0
  %v2039 = vadd.f32 %v1865, %v2038
  %v2040 = vpop.f32.mrb[0].mxu0
  %v2041 = vpop.f32.mrb[0].mxu0
  %v2042 = vadd.f32 %v1870, %v2041
  %v2043 = vpop.f32.mrb[0].mxu0
  %2044 = vmatprep.mubr.bf16.mxu0 0
  %2045 = vmatmul.mubr.bf16.gmra.mrb[0].mxu0 %v1979
  %v2046 = vpop.f32.mrb[0].mxu0
  %v2047 = vadd.f32 %v1875, %v2046
  %v2048 = vpop.f32.mrb[0].mxu0
  %v2049 = vpop.f32.mrb[0].mxu0
  %v2050 = vadd.f32 %v1880, %v2049
  %v2051 = vpop.f32.mrb[0].mxu0
  %2052 = vmatprep.mubr.bf16.mxu0 0
  %2053 = vmatmul.mubr.bf16.gmra.mrb[0].mxu0 %v1982
  %v2054 = vpop.f32.mrb[0].mxu0
  %v2055 = vadd.f32 %v1885, %v2054
  %v2056 = vpop.f32.mrb[0].mxu0
  %v2057 = vpop.f32.mrb[0].mxu0
  %v2058 = vadd.f32 %v1890, %v2057
  %v2059 = vpop.f32.mrb[0].mxu0
  %2060 = vmatprep.mubr.bf16.mxu0 0
  %2061 = vmatmul.mubr.bf16.gmra.mrb[0].mxu0 %v1985
  %v2062 = vpop.f32.mrb[0].mxu0
  %v2063 = vadd.f32 %v1895, %v2062
  %v2064 = vpop.f32.mrb[0].mxu0
  %v2065 = vpop.f32.mrb[0].mxu0
  %v2066 = vadd.f32 %v1900, %v2065
  %v2067 = vpop.f32.mrb[0].mxu0
  %2068 = vmatprep.mubr.bf16.mxu0 0
  %2069 = vmatmul.mubr.bf16.gmra.mrb[0].mxu0 %v1988
  %v2070 = vpop.f32.mrb[0].mxu0
  %v2071 = vadd.f32 %v1905, %v2070
  %v2072 = vpop.f32.mrb[0].mxu0
  %v2073 = vpop.f32.mrb[0].mxu0
  %v2074 = vadd.f32 %v1910, %v2073
  %v2075 = vpop.f32.mrb[0].mxu0
  %2076 = vmatprep.mubr.bf16.mxu0 0
  %2077 = vmatmul.mubr.bf16.gmra.mrb[0].mxu0 %v1991
  %v2078 = vpop.f32.mrb[0].mxu0
  %v2079 = vadd.f32 %v1915, %v2078
  %v2080 = vpop.f32.mrb[0].mxu0
  %v2081 = vpop.f32.mrb[0].mxu0
  %v2082 = vadd.f32 %v1920, %v2081
  %v2083 = vpop.f32.mrb[0].mxu0
  %2084 = vmatprep.mubr.bf16.mxu0 0
  %2085 = vmatmul.mubr.bf16.gmra.mrb[0].mxu0 %v1994
  %v2086 = vpop.f32.mrb[0].mxu0
  %v2087 = vadd.f32 %v1925, %v2086
  %v2088 = vpop.f32.mrb[0].mxu0
  %v2089 = vpop.f32.mrb[0].mxu0
  %v2090 = vadd.f32 %v1930, %v2089
  %v2091 = vpop.f32.mrb[0].mxu0
  %2092 = vdwg.mxu0
  %v2093 = vxor.u32 %v2031, 2147483648
  %v2094 = vxor.u32 %v2034, 2147483648
  %v2095 = vxor.u32 %v2039, 2147483648
  %v2096 = vxor.u32 %v2042, 2147483648
  %v2097 = vxor.u32 %v2047, 2147483648
  %v2098 = vxor.u32 %v2050, 2147483648
  %v2099 = vxor.u32 %v2055, 2147483648
  %v2100 = vxor.u32 %v2058, 2147483648
  %v2101 = vmul.f32 %v2093, 1.442695
  %v2102 = vpow.pop %v2101
  %v2103 = vmul.f32 %v2094, 1.442695
  %v2104 = vpow.pop %v2103
  %v2105 = vmul.f32 %v2095, 1.442695
  %v2106 = vpow.pop %v2105
  %v2107 = vmul.f32 %v2096, 1.442695
  %v2108 = vpow.pop %v2107
  %v2109 = vmul.f32 %v2097, 1.442695
  %v2110 = vpow.pop %v2109
  %v2111 = vmul.f32 %v2098, 1.442695
  %v2112 = vpow.pop %v2111
  %v2113 = vmul.f32 %v2099, 1.442695
  %v2114 = vpow.pop %v2113
  %v2115 = vmul.f32 %v2100, 1.442695
  %v2116 = vpow.pop %v2115
  %v2117 = vadd.f32 %v2102, 1.0
  %v2118 = vadd.f32 %v2104, 1.0
  %v2119 = vadd.f32 %v2106, 1.0
  %v2120 = vadd.f32 %v2108, 1.0
  %v2121 = vadd.f32 %v2110, 1.0
  %v2122 = vadd.f32 %v2112, 1.0
  %v2123 = vadd.f32 %v2114, 1.0
  %v2124 = vadd.f32 %v2116, 1.0
  %v2125 = vrcp.pop %v2117
  %v2126 = vmul.f32 1.0, %v2125
  %v2127 = vrcp.pop %v2118
  %v2128 = vmul.f32 1.0, %v2127
  %v2129 = vrcp.pop %v2119
  %v2130 = vmul.f32 1.0, %v2129
  %v2131 = vrcp.pop %v2120
  %v2132 = vmul.f32 1.0, %v2131
  %v2133 = vrcp.pop %v2121
  %v2134 = vmul.f32 1.0, %v2133
  %v2135 = vrcp.pop %v2122
  %v2136 = vmul.f32 1.0, %v2135
  %v2137 = vrcp.pop %v2123
  %v2138 = vmul.f32 1.0, %v2137
  %v2139 = vrcp.pop %v2124
  %v2140 = vmul.f32 1.0, %v2139
  %v2141 = vtanh.pop %v2063
  %v2142 = vtanh.pop %v2066
  %v2143 = vtanh.pop %v2071
  %v2144 = vtanh.pop %v2074
  %v2145 = vtanh.pop %v2079
  %v2146 = vtanh.pop %v2082
  %v2147 = vtanh.pop %v2087
  %v2148 = vtanh.pop %v2090
  %v2149 = vmul.f32 %v2126, %v2141
  %v2150 = vmul.f32 %v2128, %v2142
  %v2151 = vmul.f32 %v2130, %v2143
  %v2152 = vmul.f32 %v2132, %v2144
  %v2153 = vmul.f32 %v2134, %v2145
  %v2154 = vmul.f32 %v2136, %v2146
  %v2155 = vmul.f32 %v2138, %v2147
  %v2156 = vmul.f32 %v2140, %v2148
  %s2157 = scalar_lea.vmem %s11, 64
  %v2158 = vld [vmem:[%s2157] sm:$0xf]
  %v2159 = vld [vmem:[%s2157 + $0x4] sm:$0xf]
  %v2160 = vld [vmem:[%s2157 + $0x8] sm:$0xf]
  %v2161 = vld [vmem:[%s2157 + $0xc] sm:$0xf]
  %v2162 = vld [vmem:[%s2157 + $0x10] sm:$0xf]
  %v2163 = vld [vmem:[%s2157 + $0x14] sm:$0xf]
  %v2164 = vld [vmem:[%s2157 + $0x18] sm:$0xf]
  %v2165 = vld [vmem:[%s2157 + $0x1c] sm:$0xf]
  %v2166 = vld [vmem:[%s2157 + $0x20] sm:$0xf]
  %v2167 = vld [vmem:[%s2157 + $0x24] sm:$0xf]
  %v2168 = vld [vmem:[%s2157 + $0x28] sm:$0xf]
  %v2169 = vld [vmem:[%s2157 + $0x2c] sm:$0xf]
  %v2170 = vld [vmem:[%s2157 + $0x30] sm:$0xf]
  %v2171 = vld [vmem:[%s2157 + $0x34] sm:$0xf]
  %v2172 = vld [vmem:[%s2157 + $0x38] sm:$0xf]
  %v2173 = vld [vmem:[%s2157 + $0x3c] sm:$0xf]
  %v2174 = vpack.c.bf16 %v2150, %v2149
  %v2175 = vpack.c.bf16 %v2152, %v2151
  %v2176 = vpack.c.bf16 %v2154, %v2153
  %v2177 = vpack.c.bf16 %v2156, %v2155
  %s2178 = scalar_lea.vmem %s12, 128
  %v2179 = vld [vmem:[%s2178] sm:$0xff]
  %v2180 = vld [vmem:[%s2178 + $0x8] sm:$0xff]
  %v2181 = vld [vmem:[%s2178 + $0x10] sm:$0xff]
  %v2182 = vld [vmem:[%s2178 + $0x18] sm:$0xff]
  %v2183 = vld [vmem:[%s2178 + $0x20] sm:$0xff]
  %v2184 = vld [vmem:[%s2178 + $0x28] sm:$0xff]
  %v2185 = vld [vmem:[%s2178 + $0x30] sm:$0xff]
  %v2186 = vld [vmem:[%s2178 + $0x38] sm:$0xff]
  %v2187 = vld [vmem:[%s2178 + $0x40] sm:$0xff]
  %v2188 = vld [vmem:[%s2178 + $0x48] sm:$0xff]
  %v2189 = vld [vmem:[%s2178 + $0x50] sm:$0xff]
  %v2190 = vld [vmem:[%s2178 + $0x58] sm:$0xff]
  %v2191 = vld [vmem:[%s2178 + $0x60] sm:$0xff]
  %v2192 = vld [vmem:[%s2178 + $0x68] sm:$0xff]
  %v2193 = vld [vmem:[%s2178 + $0x70] sm:$0xff]
  %v2194 = vld [vmem:[%s2178 + $0x78] sm:$0xff]
  %2196 = vset.pattern.permute.xlu0 0
  %2197 = vperm.xlu0 %2196, %v2179
  %v2198 = vpop.permute.xlu0 %2197
  %2200 = vset.pattern.permute.xlu0 0
  %2201 = vperm.xlu0 %2200, %v2180
  %v2202 = vpop.permute.xlu0 %2201
  %2204 = vset.pattern.permute.xlu0 0
  %2205 = vperm.xlu0 %2204, %v2181
  %v2206 = vpop.permute.xlu0 %2205
  %2208 = vset.pattern.permute.xlu0 0
  %2209 = vperm.xlu0 %2208, %v2182
  %v2210 = vpop.permute.xlu0 %2209
  %2212 = vset.pattern.permute.xlu0 0
  %2213 = vperm.xlu0 %2212, %v2183
  %v2214 = vpop.permute.xlu0 %2213
  %2216 = vset.pattern.permute.xlu0 0
  %2217 = vperm.xlu0 %2216, %v2184
  %v2218 = vpop.permute.xlu0 %2217
  %2220 = vset.pattern.permute.xlu0 0
  %2221 = vperm.xlu0 %2220, %v2185
  %v2222 = vpop.permute.xlu0 %2221
  %2224 = vset.pattern.permute.xlu0 0
  %2225 = vperm.xlu0 %2224, %v2186
  %v2226 = vpop.permute.xlu0 %2225
  %2228 = vset.pattern.permute.xlu0 0
  %2229 = vperm.xlu0 %2228, %v2187
  %v2230 = vpop.permute.xlu0 %2229
  %2233 = vset.pattern.permute.xlu0 0
  %2234 = vperm.xlu0 %2233, %v2188
  %v2235 = vpop.permute.xlu0 %2234
  %2238 = vset.pattern.permute.xlu0 0
  %2239 = vperm.xlu0 %2238, %v2189
  %v2240 = vpop.permute.xlu0 %2239
  %2243 = vset.pattern.permute.xlu0 0
  %2244 = vperm.xlu0 %2243, %v2190
  %v2245 = vpop.permute.xlu0 %2244
  %2248 = vset.pattern.permute.xlu0 0
  %2249 = vperm.xlu0 %2248, %v2191
  %v2250 = vpop.permute.xlu0 %2249
  %2253 = vset.pattern.permute.xlu0 0
  %2254 = vperm.xlu0 %2253, %v2192
  %v2255 = vpop.permute.xlu0 %2254
  %2258 = vset.pattern.permute.xlu0 0
  %2259 = vperm.xlu0 %2258, %v2193
  %v2260 = vpop.permute.xlu0 %2259
  %2263 = vset.pattern.permute.xlu0 0
  %2264 = vperm.xlu0 %2263, %v2194
  %v2265 = vpop.permute.xlu0 %2264
  %v2283 = vunpack.c.l.b16 %v2158
  %v2284 = vunpack.c.l.b16 %v2159
  %v2285 = vunpack.c.l.b16 %v2160
  %v2286 = vunpack.c.l.b16 %v2161
  %v2287 = vunpack.c.l.b16 %v2162
  %v2288 = vunpack.c.l.b16 %v2163
  %v2289 = vunpack.c.l.b16 %v2164
  %v2290 = vunpack.c.l.b16 %v2165
  %v2291 = vunpack.c.l.b16 %v2166
  %v2292 = vunpack.c.l.b16 %v2167
  %v2293 = vunpack.c.l.b16 %v2168
  %v2294 = vunpack.c.l.b16 %v2169
  %v2295 = vunpack.c.l.b16 %v2170
  %v2296 = vunpack.c.l.b16 %v2171
  %v2297 = vunpack.c.l.b16 %v2172
  %v2298 = vunpack.c.l.b16 %v2173
  %v2299 = vpack.c.b16 %v2284, %v2283
  %v2300 = vpack.c.b16 %v2286, %v2285
  %v2301 = vpack.c.b16 %v2288, %v2287
  %v2302 = vpack.c.b16 %v2290, %v2289
  %v2303 = vpack.c.b16 %v2292, %v2291
  %v2304 = vpack.c.b16 %v2294, %v2293
  %v2305 = vpack.c.b16 %v2296, %v2295
  %v2306 = vpack.c.b16 %v2298, %v2297
  %v2308 = vsel %vm643, %v2299, 0
  %v2311 = vsel %vm643, %v2300, 0
  %v2314 = vsel %vm643, %v2301, 0
  %v2317 = vsel %vm643, %v2302, 0
  %v2320 = vsel %vm643, %v2303, 0
  %v2323 = vsel %vm643, %v2304, 0
  %v2326 = vsel %vm643, %v2305, 0
  %v2329 = vsel %vm643, %v2306, 0
  %2331 = vmatprep.subr.bf16.mxu0 0
  %2332 = vmatpush1.bf16.msra.mxu0 %v2174
  %2333 = vmatprep.subr.bf16.mxu0 0
  %2334 = vmatpush1.bf16.msra.mxu0 %v2175
  %2335 = vmatprep.subr.bf16.mxu0 0
  %2336 = vmatpush1.bf16.msra.mxu0 %v2176
  %2337 = vmatprep.subr.bf16.mxu0 0
  %2338 = vmatpush1.bf16.msra.mxu0 %v2177
  %2339 = vmatprep.subr.bf16.mxu0 0
  %2340 = vmatpush1.bf16.msra.mxu0 0
  %2341 = vmatprep.subr.bf16.mxu0 0
  %2342 = vmatpush1.bf16.msra.mxu0 0
  %2343 = vmatprep.subr.bf16.mxu0 0
  %2344 = vmatpush1.bf16.msra.mxu0 0
  %2345 = vmatprep.subr.bf16.mxu0 0
  %2346 = vmatpush1.bf16.msra.mxu0 0
  %2347 = vmatprep.subr.bf16.mxu0 0
  %2348 = vmatpush1.bf16.msra.mxu0 0
  %2349 = vmatprep.subr.bf16.mxu0 0
  %2350 = vmatpush1.bf16.msra.mxu0 0
  %2351 = vmatprep.subr.bf16.mxu0 0
  %2352 = vmatpush1.bf16.msra.mxu0 0
  %2353 = vmatprep.subr.bf16.mxu0 0
  %2354 = vmatpush1.bf16.msra.mxu0 0
  %2355 = vmatprep.subr.bf16.mxu0 0
  %2356 = vmatpush1.bf16.msra.mxu0 0
  %2357 = vmatprep.subr.bf16.mxu0 0
  %2358 = vmatpush1.bf16.msra.mxu0 0
  %2359 = vmatprep.subr.bf16.mxu0 0
  %2360 = vmatpush1.bf16.msra.mxu0 0
  %2361 = vmatprep.subr.bf16.mxu0 0
  %2362 = vmatpush1.bf16.msra.mxu0 0
  %2363 = vmatprep.mubr.bf16.mxu0 0
  %2364 = vmatmul.mubr.bf16.gmra.mrb[0].mxu0 %v2308
  %v2365 = vpop.f32.mrb[0].mxu0
  %v2366 = vpop.f32.mrb[0].mxu0
  %v2367 = vpop.f32.mrb[0].mxu0
  %v2368 = vpop.f32.mrb[0].mxu0
  %2369 = vmatprep.mubr.bf16.mxu0 0
  %2370 = vmatmul.mubr.bf16.gmra.mrb[0].mxu0 %v2311
  %v2371 = vpop.f32.mrb[0].mxu0
  %v2372 = vpop.f32.mrb[0].mxu0
  %v2373 = vpop.f32.mrb[0].mxu0
  %v2374 = vpop.f32.mrb[0].mxu0
  %2375 = vmatprep.mubr.bf16.mxu0 0
  %2376 = vmatmul.mubr.bf16.gmra.mrb[0].mxu0 %v2314
  %v2377 = vpop.f32.mrb[0].mxu0
  %v2378 = vpop.f32.mrb[0].mxu0
  %v2379 = vpop.f32.mrb[0].mxu0
  %v2380 = vpop.f32.mrb[0].mxu0
  %2381 = vmatprep.mubr.bf16.mxu0 0
  %2382 = vmatmul.mubr.bf16.gmra.mrb[0].mxu0 %v2317
  %v2383 = vpop.f32.mrb[0].mxu0
  %v2384 = vpop.f32.mrb[0].mxu0
  %v2385 = vpop.f32.mrb[0].mxu0
  %v2386 = vpop.f32.mrb[0].mxu0
  %2387 = vmatprep.mubr.bf16.mxu0 0
  %2388 = vmatmul.mubr.bf16.gmra.mrb[0].mxu0 %v2320
  %v2389 = vpop.f32.mrb[0].mxu0
  %v2390 = vadd.f32 %v2230, %v2389
  %v2391 = vpop.f32.mrb[0].mxu0
  %v2392 = vpop.f32.mrb[0].mxu0
  %v2393 = vadd.f32 %v2235, %v2392
  %v2394 = vpop.f32.mrb[0].mxu0
  %2395 = vmatprep.mubr.bf16.mxu0 0
  %2396 = vmatmul.mubr.bf16.gmra.mrb[0].mxu0 %v2323
  %v2397 = vpop.f32.mrb[0].mxu0
  %v2398 = vadd.f32 %v2240, %v2397
  %v2399 = vpop.f32.mrb[0].mxu0
  %v2400 = vpop.f32.mrb[0].mxu0
  %v2401 = vadd.f32 %v2245, %v2400
  %v2402 = vpop.f32.mrb[0].mxu0
  %2403 = vmatprep.mubr.bf16.mxu0 0
  %2404 = vmatmul.mubr.bf16.gmra.mrb[0].mxu0 %v2326
  %v2405 = vpop.f32.mrb[0].mxu0
  %v2406 = vadd.f32 %v2250, %v2405
  %v2407 = vpop.f32.mrb[0].mxu0
  %v2408 = vpop.f32.mrb[0].mxu0
  %v2409 = vadd.f32 %v2255, %v2408
  %v2410 = vpop.f32.mrb[0].mxu0
  %2411 = vmatprep.mubr.bf16.mxu0 0
  %2412 = vmatmul.mubr.bf16.gmra.mrb[0].mxu0 %v2329
  %v2413 = vpop.f32.mrb[0].mxu0
  %v2414 = vadd.f32 %v2260, %v2413
  %v2415 = vpop.f32.mrb[0].mxu0
  %v2416 = vpop.f32.mrb[0].mxu0
  %v2417 = vadd.f32 %v2265, %v2416
  %v2418 = vpop.f32.mrb[0].mxu0
  %2419 = vdwg.mxu0
  %v2420 = vadd.f32 %v1363, %v2390
  %v2421 = vadd.f32 %v1364, %v2393
  %v2422 = vadd.f32 %v1365, %v2398
  %v2423 = vadd.f32 %v1366, %v2401
  %v2424 = vadd.f32 %v1367, %v2406
  %v2425 = vadd.f32 %v1368, %v2409
  %v2426 = vadd.f32 %v1369, %v2414
  %v2427 = vadd.f32 %v1370, %v2417
  %v2428 = vld [vmem:[%s13] sm:$0xf]
  %v2429 = vld [vmem:[%s13 + $0x4] sm:$0xf]
  %v2430 = vld [vmem:[%s13 + $0x8] sm:$0xf]
  %v2431 = vld [vmem:[%s13 + $0xc] sm:$0xf]
  %v2432 = vld [vmem:[%s13 + $0x10] sm:$0xf]
  %v2433 = vld [vmem:[%s13 + $0x14] sm:$0xf]
  %v2434 = vld [vmem:[%s13 + $0x18] sm:$0xf]
  %v2435 = vld [vmem:[%s13 + $0x1c] sm:$0xf]
  %v2436 = vpack.c.bf16 %v2421, %v2420
  %v2437 = vpack.c.bf16 %v2423, %v2422
  %v2438 = vpack.c.bf16 %v2425, %v2424
  %v2439 = vpack.c.bf16 %v2427, %v2426
  %v2440 = vld [vmem:[%s14] sm:$0xff]
  %v2441 = vld [vmem:[%s14 + $0x8] sm:$0xff]
  %v2442 = vld [vmem:[%s14 + $0x10] sm:$0xff]
  %v2443 = vld [vmem:[%s14 + $0x18] sm:$0xff]
  %v2444 = vld [vmem:[%s14 + $0x20] sm:$0xff]
  %v2445 = vld [vmem:[%s14 + $0x28] sm:$0xff]
  %v2446 = vld [vmem:[%s14 + $0x30] sm:$0xff]
  %v2447 = vld [vmem:[%s14 + $0x38] sm:$0xff]
  %2449 = vset.pattern.permute.xlu0 0
  %2450 = vperm.xlu0 %2449, %v2440
  %v2451 = vpop.permute.xlu0 %2450
  %2454 = vset.pattern.permute.xlu0 0
  %2455 = vperm.xlu0 %2454, %v2441
  %v2456 = vpop.permute.xlu0 %2455
  %2459 = vset.pattern.permute.xlu0 0
  %2460 = vperm.xlu0 %2459, %v2442
  %v2461 = vpop.permute.xlu0 %2460
  %2464 = vset.pattern.permute.xlu0 0
  %2465 = vperm.xlu0 %2464, %v2443
  %v2466 = vpop.permute.xlu0 %2465
  %2469 = vset.pattern.permute.xlu0 0
  %2470 = vperm.xlu0 %2469, %v2444
  %v2471 = vpop.permute.xlu0 %2470
  %2474 = vset.pattern.permute.xlu0 0
  %2475 = vperm.xlu0 %2474, %v2445
  %v2476 = vpop.permute.xlu0 %2475
  %2479 = vset.pattern.permute.xlu0 0
  %2480 = vperm.xlu0 %2479, %v2446
  %v2481 = vpop.permute.xlu0 %2480
  %2484 = vset.pattern.permute.xlu0 0
  %2485 = vperm.xlu0 %2484, %v2447
  %v2486 = vpop.permute.xlu0 %2485
  %v2496 = vunpack.c.l.b16 %v2428
  %v2497 = vunpack.c.l.b16 %v2429
  %v2498 = vunpack.c.l.b16 %v2430
  %v2499 = vunpack.c.l.b16 %v2431
  %v2500 = vunpack.c.l.b16 %v2432
  %v2501 = vunpack.c.l.b16 %v2433
  %v2502 = vunpack.c.l.b16 %v2434
  %v2503 = vunpack.c.l.b16 %v2435
  %v2504 = vpack.c.b16 %v2497, %v2496
  %v2505 = vpack.c.b16 %v2499, %v2498
  %v2506 = vpack.c.b16 %v2501, %v2500
  %v2507 = vpack.c.b16 %v2503, %v2502
  %v2509 = vsel %vm643, %v2504, 0
  %v2512 = vsel %vm643, %v2505, 0
  %v2515 = vsel %vm643, %v2506, 0
  %v2518 = vsel %vm643, %v2507, 0
  %2520 = vmatprep.subr.bf16.mxu0 0
  %2521 = vmatpush1.bf16.msra.mxu0 %v2436
  %2522 = vmatprep.subr.bf16.mxu0 0
  %2523 = vmatpush1.bf16.msra.mxu0 %v2437
  %2524 = vmatprep.subr.bf16.mxu0 0
  %2525 = vmatpush1.bf16.msra.mxu0 %v2438
  %2526 = vmatprep.subr.bf16.mxu0 0
  %2527 = vmatpush1.bf16.msra.mxu0 %v2439
  %2528 = vmatprep.subr.bf16.mxu0 0
  %2529 = vmatpush1.bf16.msra.mxu0 0
  %2530 = vmatprep.subr.bf16.mxu0 0
  %2531 = vmatpush1.bf16.msra.mxu0 0
  %2532 = vmatprep.subr.bf16.mxu0 0
  %2533 = vmatpush1.bf16.msra.mxu0 0
  %2534 = vmatprep.subr.bf16.mxu0 0
  %2535 = vmatpush1.bf16.msra.mxu0 0
  %2536 = vmatprep.subr.bf16.mxu0 0
  %2537 = vmatpush1.bf16.msra.mxu0 0
  %2538 = vmatprep.subr.bf16.mxu0 0
  %2539 = vmatpush1.bf16.msra.mxu0 0
  %2540 = vmatprep.subr.bf16.mxu0 0
  %2541 = vmatpush1.bf16.msra.mxu0 0
  %2542 = vmatprep.subr.bf16.mxu0 0
  %2543 = vmatpush1.bf16.msra.mxu0 0
  %2544 = vmatprep.subr.bf16.mxu0 0
  %2545 = vmatpush1.bf16.msra.mxu0 0
  %2546 = vmatprep.subr.bf16.mxu0 0
  %2547 = vmatpush1.bf16.msra.mxu0 0
  %2548 = vmatprep.subr.bf16.mxu0 0
  %2549 = vmatpush1.bf16.msra.mxu0 0
  %2550 = vmatprep.subr.bf16.mxu0 0
  %2551 = vmatpush1.bf16.msra.mxu0 0
  %2552 = vmatprep.mubr.bf16.mxu0 0
  %2553 = vmatmul.mubr.bf16.gmra.mrb[0].mxu0 %v2509
  %v2554 = vpop.f32.mrb[0].mxu0
  %v2555 = vadd.f32 %v2451, %v2554
  %v2556 = vpop.f32.mrb[0].mxu0
  %v2557 = vpop.f32.mrb[0].mxu0
  %v2558 = vadd.f32 %v2456, %v2557
  %v2559 = vpop.f32.mrb[0].mxu0
  %2560 = vmatprep.mubr.bf16.mxu0 0
  %2561 = vmatmul.mubr.bf16.gmra.mrb[0].mxu0 %v2512
  %v2562 = vpop.f32.mrb[0].mxu0
  %v2563 = vadd.f32 %v2461, %v2562
  %v2564 = vpop.f32.mrb[0].mxu0
  %v2565 = vpop.f32.mrb[0].mxu0
  %v2566 = vadd.f32 %v2466, %v2565
  %v2567 = vpop.f32.mrb[0].mxu0
  %2568 = vmatprep.mubr.bf16.mxu0 0
  %2569 = vmatmul.mubr.bf16.gmra.mrb[0].mxu0 %v2515
  %v2570 = vpop.f32.mrb[0].mxu0
  %v2571 = vadd.f32 %v2471, %v2570
  %v2572 = vpop.f32.mrb[0].mxu0
  %v2573 = vpop.f32.mrb[0].mxu0
  %v2574 = vadd.f32 %v2476, %v2573
  %v2575 = vpop.f32.mrb[0].mxu0
  %2576 = vmatprep.mubr.bf16.mxu0 0
  %2577 = vmatmul.mubr.bf16.gmra.mrb[0].mxu0 %v2518
  %v2578 = vpop.f32.mrb[0].mxu0
  %v2579 = vadd.f32 %v2481, %v2578
  %v2580 = vpop.f32.mrb[0].mxu0
  %v2581 = vpop.f32.mrb[0].mxu0
  %v2582 = vadd.f32 %v2486, %v2581
  %v2583 = vpop.f32.mrb[0].mxu0
  %2584 = vdwg.mxu0
  %v2585 = vmax.f32 %v2555, 0.0
  %v2586 = vmax.f32 %v2558, 0.0
  %v2587 = vmax.f32 %v2563, 0.0
  %v2588 = vmax.f32 %v2566, 0.0
  %v2589 = vmax.f32 %v2571, 0.0
  %v2590 = vmax.f32 %v2574, 0.0
  %v2591 = vmax.f32 %v2579, 0.0
  %v2592 = vmax.f32 %v2582, 0.0
  %v2593 = vld [vmem:[%s15] sm:$0x7]
  %v2594 = vpack.c.bf16 %v2586, %v2585
  %v2595 = vpack.c.bf16 %v2588, %v2587
  %v2596 = vpack.c.bf16 %v2590, %v2589
  %v2597 = vpack.c.bf16 %v2592, %v2591
  %v2598 = vld [vmem:[%s16] sm:$0x3f]
  %2600 = vset.pattern.permute.xlu0 0
  %2601 = vperm.xlu0 %2600, %v2598
  %v2602 = vpop.permute.xlu0 %2601
  %v2605 = vsel %vm643, %v2593, 0
  %2607 = vmatprep.subr.bf16.mxu0 0
  %2608 = vmatpush1.bf16.msra.mxu0 %v2594
  %2609 = vmatprep.subr.bf16.mxu0 0
  %2610 = vmatpush1.bf16.msra.mxu0 %v2595
  %2611 = vmatprep.subr.bf16.mxu0 0
  %2612 = vmatpush1.bf16.msra.mxu0 %v2596
  %2613 = vmatprep.subr.bf16.mxu0 0
  %2614 = vmatpush1.bf16.msra.mxu0 %v2597
  %2615 = vmatprep.subr.bf16.mxu0 0
  %2616 = vmatpush1.bf16.msra.mxu0 0
  %2617 = vmatprep.subr.bf16.mxu0 0
  %2618 = vmatpush1.bf16.msra.mxu0 0
  %2619 = vmatprep.subr.bf16.mxu0 0
  %2620 = vmatpush1.bf16.msra.mxu0 0
  %2621 = vmatprep.subr.bf16.mxu0 0
  %2622 = vmatpush1.bf16.msra.mxu0 0
  %2623 = vmatprep.subr.bf16.mxu0 0
  %2624 = vmatpush1.bf16.msra.mxu0 0
  %2625 = vmatprep.subr.bf16.mxu0 0
  %2626 = vmatpush1.bf16.msra.mxu0 0
  %2627 = vmatprep.subr.bf16.mxu0 0
  %2628 = vmatpush1.bf16.msra.mxu0 0
  %2629 = vmatprep.subr.bf16.mxu0 0
  %2630 = vmatpush1.bf16.msra.mxu0 0
  %2631 = vmatprep.subr.bf16.mxu0 0
  %2632 = vmatpush1.bf16.msra.mxu0 0
  %2633 = vmatprep.subr.bf16.mxu0 0
  %2634 = vmatpush1.bf16.msra.mxu0 0
  %2635 = vmatprep.subr.bf16.mxu0 0
  %2636 = vmatpush1.bf16.msra.mxu0 0
  %2637 = vmatprep.subr.bf16.mxu0 0
  %2638 = vmatpush1.bf16.msra.mxu0 0
  %2639 = vmatprep.mubr.bf16.mxu0 0
  %2640 = vmatmul.mubr.bf16.gmra.mrb[0].mxu0 %v2605
  %v2641 = vpop.f32.mrb[0].mxu0
  %v2642 = vadd.f32 %v2602, %v2641
  %v2643 = vpop.f32.mrb[0].mxu0
  %v2644 = vpop.f32.mrb[0].mxu0
  %v2645 = vpop.f32.mrb[0].mxu0
  %2646 = vdwg.mxu0
  %2647 = vst [vmem:[%s17] sm:$0x3f] %v2642
  // Predicated region
  $region70: #{lift_ct_gcn_forward.1} parent=0 // pred_check
    _
  $region71: #{lift_ct_gcn_forward.1} parent=0 // pred_check_branch
    %2649 = sbr.rel (0) target = $region73
  $region72: #{lift_ct_gcn_forward.1} parent=0 // pred_region
    _
  $region73: #{lift_ct_gcn_forward.1} parent=0 // pred_fallthru
    _
  // Predicated region
  $region74: #{lift_ct_gcn_forward.1} parent=0 // pred_check
    _
  $region75: #{lift_ct_gcn_forward.1} parent=0 // pred_check_branch
    %2651 = sbr.rel (0) target = $region77
  $region76: #{lift_ct_gcn_forward.1} parent=0 // pred_region
    _
  $region77: #{lift_ct_gcn_forward.1} parent=0 // pred_fallthru
    _

</llo_original>
